<compile_context>
chip_gen: v7x
topology: tpu7x:2x2x1
jax: 0.10.0
libtpu: 0.0.40
codegen_flags: <defaults>
</compile_context>

<pallas_src>
import jax
import jax.numpy as jnp
from jax import lax
from jax.experimental import pallas as pl
from jax.experimental.pallas import tpu as pltpu


# Deterministic stand-in for the original `config`
LOSS_OPTS = ['WEUC', 'MANHATTAN', 'CHAMP', 'CHORDAL', 'GEODESIC', 'EUCTR']
LOSS_WEIGHTS = [1.0, 0.5, 1.0, 0.3, 0.2, 0.4]

_LANE = 128
# Plain Python floats (NOT jnp arrays) so they lower to jaxpr literals.
_BIG = 1e30           # pushes padded rows/cols out of every NN min
_MASK_THRESH = 1e20   # any real squared distance is far below this


def quaternion_to_matrix(q):
    """pytorch3d convention: real-part-first (r, i, j, k); no pre-normalization."""
    r, i, j, k = q[..., 0], q[..., 1], q[..., 2], q[..., 3]
    two_s = 2.0 / jnp.sum(q * q, axis=-1)
    o = jnp.stack(
        [
            1 - two_s * (j * j + k * k), two_s * (i * j - k * r), two_s * (i * k + j * r),
            two_s * (i * j + k * r), 1 - two_s * (i * i + k * k), two_s * (j * k - i * r),
            two_s * (i * k - j * r), two_s * (j * k + i * r), 1 - two_s * (i * i + j * j),
        ],
        axis=-1,
    )
    return o.reshape(q.shape[:-1] + (3, 3))


def _round_up(x, m):
    return ((x + m - 1) // m) * m


def _choose_tiles(n):
    """Return (padded N, i-tile, j-tile); tiles are multiples of 128 dividing padded N."""
    np_pad = _round_up(n, _LANE)
    if np_pad <= 512:
        # tiny clouds: small tiles, exercises the multi-tile path in the demo
        return np_pad, _LANE, _LANE
    # big clouds: ti=256 keeps the per-step d1 lane-fold + one column group inside
    # the 64x4KiB vreg file; tj=512 amortizes per-step overhead.
    ti, tj = 256, 512
    np_pad = _round_up(np_pad, 512)   # both 256 and 512 divide this
    return np_pad, ti, tj


def _make_point_loss_kernel(ti, tj, ni, nj, gt_resident):
    """Kernel over grid (B, ni, nj). Per-batch partial sums land in out lanes 0..4:
       [sum(weighted_euc), sum(euc), sum(manhattan), sum(sqrt(d1)), sum(sqrt(d2))]."""
    n_groups = tj // _LANE
    n_rowblk = ti // 8

    def kernel(rinv_ref, tinv_ref, cen_ref, pred_ref, gti_ref, gtj_ref, out_ref,
               a_ref, d1_ref, d2_ref, acc_ref):
        b = pl.program_id(0)
        i = pl.program_id(1)
        j = pl.program_id(2)
        lane = lax.broadcasted_iota(jnp.int32, (1, _LANE), 1)

        # ---- per-batch reset + constant rows of the augmented chamfer LHS ----
        @pl.when(jnp.logical_and(i == 0, j == 0))
        def _():
            acc_ref[...] = jnp.zeros_like(acc_ref)
            a_ref[4:5, :] = jnp.ones((1, ti), jnp.float32)
            a_ref[5:8, :] = jnp.zeros((3, ti), jnp.float32)

        # ---- once per i-tile: rigid transform + WEUC/EUC/MAN partial sums +
        #      cache the data-dependent rows of the augmented chamfer LHS ----
        @pl.when(j == 0)
        def _():
            p = pred_ref[0]                                   # (4, ti)
            px, py, pz, valid = p[0:1, :], p[1:2, :], p[2:3, :], p[3:4, :]

            # inverse rigid transform of predicted pose: p' = R^T p - R^T t
            tx = rinv_ref[b, 0] * px + rinv_ref[b, 1] * py + rinv_ref[b, 2] * pz + tinv_ref[b, 0]
            ty = rinv_ref[b, 3] * px + rinv_ref[b, 4] * py + rinv_ref[b, 5] * pz + tinv_ref[b, 1]
            tz = rinv_ref[b, 6] * px + rinv_ref[b, 7] * py + rinv_ref[b, 8] * pz + tinv_ref[b, 2]

            g = gti_ref[0]                                    # (3, ti) centroid-shifted GT
            gx, gy, gz = g[0:1, :], g[1:2, :], g[2:3, :]

            # centroid-shifted predicted points (distances are shift invariant)
            txc = tx - cen_ref[b, 0]
            tyc = ty - cen_ref[b, 1]
            tzc = tz - cen_ref[b, 2]

            dx, dy, dz = gx - txc, gy - tyc, gz - tzc
            euc = jnp.sqrt(dx * dx + dy * dy + dz * dz) * valid
            man = (jnp.abs(dx) + jnp.abs(dy) + jnp.abs(dz)) * valid

            # WEUC weighting uses the UNshifted transformed-point range
            rng = jnp.sqrt(tx * tx + ty * ty + tz * tz)
            small = rng < 1.0
            safe = jnp.where(small, 1e-5, rng)
            weight = jnp.where(small, 0.0, 80.0 / safe)

            row = jnp.where(lane == 0, jnp.sum(euc * weight, keepdims=True), 0.0)
            row = row + jnp.where(lane == 1, jnp.sum(euc, keepdims=True), 0.0)
            row = row + jnp.where(lane == 2, jnp.sum(man, keepdims=True), 0.0)
            acc_ref[...] += row

            # data-dependent rows of the (8, ti) augmented chamfer LHS
            a_ref[0:1, :] = -2.0 * txc
            a_ref[1:2, :] = -2.0 * tyc
            a_ref[2:3, :] = -2.0 * tzc
            a_ref[3:4, :] = txc * txc + tyc * tyc + tzc * tzc + (1.0 - valid) * _BIG

        # ---- chamfer block: 128-lane column-group MXU contractions with FUSED
        #      d1 lane-fold + d2 sublane-fold; the full (ti, tj) distance block
        #      is never materialized in VMEM ----
        if gt_resident:
            gtile = gtj_ref[j]          # (8, tj) slice of the batch-resident slab
        else:
            gtile = gtj_ref[0]          # (8, tj) streamed j-tile

        a = a_ref[...]                  # (8, ti)
        local1 = None                   # running lane-fold of d1, (ti, 128)
        f2_parts = []
        for gidx in range(n_groups):
            cols = gtile[:, gidx * _LANE:(gidx + 1) * _LANE]               # (8, 128)
            dg = lax.dot_general(a, cols, (((0,), (0,)), ((), ())),
                                 preferred_element_type=jnp.float32)       # (ti, 128)
            local1 = dg if local1 is None else jnp.minimum(local1, dg)
            f2 = dg[0:8, :]
            for r in range(1, n_rowblk):
                f2 = jnp.minimum(f2, dg[r * 8:(r + 1) * 8, :])
            f2_parts.append(f2)                                            # (8, 128)
        local2 = f2_parts[0] if n_groups == 1 else jnp.concatenate(f2_parts, axis=1)

        # d1 running min across j-tiles (one VMEM round-trip per grid step)
        @pl.when(j == 0)
        def _():
            d1_ref[...] = local1

        @pl.when(j != 0)
        def _():
            d1_ref[...] = jnp.minimum(d1_ref[...], local1)

        # d2 running min across i-tiles, per j-slot
        @pl.when(i == 0)
        def _():
            d2_ref[j] = local2

        @pl.when(i != 0)
        def _():
            d2_ref[j] = jnp.minimum(d2_ref[j], local2)

        # ---- finalize d1 for this i-tile (last j-tile) ----
        @pl.when(j == nj - 1)
        def _():
            d1 = jnp.maximum(jnp.min(d1_ref[...], axis=1, keepdims=True), 0.0)  # (ti,1)
            sq1 = jnp.where(d1 > _MASK_THRESH, 0.0, jnp.sqrt(d1))
            acc_ref[...] += jnp.where(lane == 3, jnp.sum(sq1, keepdims=True), 0.0)

        # ---- finalize d2 for this j-slot (last i-tile): spread over the i==ni-1
        #      row instead of one unrolled O(nj) batch epilogue ----
        @pl.when(i == ni - 1)
        def _():
            mn = jnp.maximum(jnp.min(d2_ref[j], axis=0, keepdims=True), 0.0)    # (1,tj)
            sq2 = jnp.where(mn > _MASK_THRESH, 0.0, jnp.sqrt(mn))
            acc_ref[...] += jnp.where(lane == 4, jnp.sum(sq2, keepdims=True), 0.0)

        # ---- write the per-batch output on the batch's final block ----
        @pl.when(jnp.logical_and(i == ni - 1, j == nj - 1))
        def _():
            out_ref[0] = acc_ref[...]

    return kernel


def _point_losses(rinv, tinv, cen, pred_in, gt3, gt_aug, ti, tj):
    """rinv (B,9), tinv (B,3), cen (B,3) in SMEM; pred_in (B,4,Np), gt3 (B,3,Np),
       gt_aug (B,8,Np).  Returns (B,128) partial-sum lanes."""
    B, _, np_pad = pred_in.shape
    ni = np_pad // ti
    nj = np_pad // tj

    # (B, 8, Np) -> (B, nj, 8, tj): j-tiles along the leading (cheaply dynamically
    # indexed) axis of the resident slab.
    gt_aug_t = gt_aug.reshape(B, 8, nj, tj).transpose(0, 2, 1, 3)

    slab_bytes = 32 * np_pad  # one resident (nj, 8, tj) f32 slab
    # Keep the (double-buffered) resident slab well under v7x's 64 MiB physical VMEM.
    gt_resident = slab_bytes <= 20 * 1024 * 1024

    kernel = _make_point_loss_kernel(ti, tj, ni, nj, gt_resident)

    if gt_resident:
        # batch-resident: block index constant over (i, j) -> DMA'd once per batch
        gtj_spec = pl.BlockSpec((pl.Squeezed(), nj, 8, tj), lambda b, i, j: (b, 0, 0, 0))
        gtj_bytes = 2 * slab_bytes
    else:
        # streamed fallback for very large clouds (v7x VMEM cap)
        # TODO(synk): pipeline_mode=pl.Buffered(3) on this spec to hide DMA latency.
        gtj_spec = pl.BlockSpec((pl.Squeezed(), 1, 8, tj), lambda b, i, j: (b, j, 0, 0))
        gtj_bytes = 2 * 8 * tj * 4

    scratch_bytes = (8 * ti + ti * _LANE + nj * 8 * tj + _LANE) * 4
    input_bytes = 2 * (4 + 3) * ti * 4 + gtj_bytes + 2 * _LANE * 4
    vmem_limit = int(min(100 * 1024 * 1024,
                         max(32 * 1024 * 1024, int(1.3 * (scratch_bytes + input_bytes)))))

    flops = 2 * B * np_pad * np_pad * 8
    bytes_accessed = 4 * B * ((4 + 3 + 8) * np_pad + _LANE)

    out = pl.pallas_call(
        kernel,
        out_shape=jax.ShapeDtypeStruct((B, 1, _LANE), jnp.float32),
        grid_spec=pltpu.PrefetchScalarGridSpec(
            num_scalar_prefetch=0,
            grid=(B, ni, nj),
            in_specs=[
                pl.BlockSpec(memory_space=pltpu.MemorySpace.SMEM),        # rinv (B,9)
                pl.BlockSpec(memory_space=pltpu.MemorySpace.SMEM),        # tinv (B,3)
                pl.BlockSpec(memory_space=pltpu.MemorySpace.SMEM),        # cen  (B,3)
                pl.BlockSpec((1, 4, ti), lambda b, i, j: (b, 0, i)),      # pred i-tile
                pl.BlockSpec((1, 3, ti), lambda b, i, j: (b, 0, i)),      # GT   i-tile (3 rows)
                gtj_spec,                                                 # GT augmented slab
            ],
            out_specs=pl.BlockSpec((1, 1, _LANE), lambda b, i, j: (b, 0, 0)),
            scratch_shapes=[
                pltpu.VMEM((8, ti), jnp.float32),        # cached augmented chamfer LHS
                pltpu.VMEM((ti, _LANE), jnp.float32),    # lane-folded d1 running min
                pltpu.VMEM((nj, 8, tj), jnp.float32),    # sublane-folded d2 running min
                pltpu.VMEM((1, _LANE), jnp.float32),     # per-batch loss accumulators
            ],
        ),
        compiler_params=pltpu.CompilerParams(
            # TODO(synk): on v7x with B==1, split the i axis across the two
            # TensorCores (per-core d2 partials + combine) to avoid an idle core.
            dimension_semantics=("parallel", "arbitrary", "arbitrary"),
            vmem_limit_bytes=vmem_limit,
        ),
        cost_estimate=pl.CostEstimate(
            flops=flops, transcendentals=4 * B * np_pad, bytes_accessed=bytes_accessed),
    )(rinv, tinv, cen, pred_in, gt3, gt_aug_t)
    return out[:, 0, :]  # (B, 128); lanes 0..4 used


def get_loss(predTR, colorImg, lidarImg, lidarImgGT, gtTR, projMat,
             loss_opts=LOSS_OPTS, loss_weights=LOSS_WEIGHTS):
    # colorImg / projMat are unused by the reference forward pass as well.
    del colorImg, projMat
    quat, trans = predTR
    B = quat.shape[0]

    rot = quaternion_to_matrix(quat)                               # (B, 3, 3)
    T = (jnp.zeros((B, 4, 4), jnp.float32)
         .at[:, :3, :3].set(rot)
         .at[:, :3, 3].set(trans)
         .at[:, 3, 3].set(1.0))                                    # SE3 (pred)
    rot_inv = jnp.swapaxes(rot, 1, 2)                              # R^T
    t_inv = -jnp.einsum('bij,bj->bi', rot_inv, trans)              # -R^T t

    _, _, H, W = lidarImg.shape
    N = H * W
    pts = lidarImg[:, :3, :, :].reshape(B, 3, N).astype(jnp.float32)
    gt_pts = lidarImgGT[:, :3, :, :].reshape(B, 3, N).astype(jnp.float32)

    np_pad, ti, tj = _choose_tiles(N)
    pad = np_pad - N

    # Centroid shift (numerics of the -2p.q + |p|^2 + |q|^2 chamfer expansion).
    cen = jnp.mean(gt_pts, axis=-1)                                # (B, 3)
    gt_c = gt_pts - cen[:, :, None]

    padcfg = ((0, 0), (0, 0), (0, pad))
    pts_p = jnp.pad(pts, padcfg)
    gt3 = jnp.pad(gt_c, padcfg)                                    # (B,3,Np) centroid-shifted GT
    valid = jnp.pad(jnp.ones((B, 1, N), jnp.float32), padcfg)      # (B,1,Np)

    pred_in = jnp.concatenate([pts_p, valid], axis=1)              # (B,4,Np): x,y,z,valid
    gx, gy, gz = gt3[:, 0:1], gt3[:, 1:2], gt3[:, 2:3]
    sq_g = gx * gx + gy * gy + gz * gz + (1.0 - valid) * _BIG
    ones = jnp.ones_like(gx)
    zeros = jnp.zeros_like(gx)
    gt_aug = jnp.concatenate([gx, gy, gz, ones, sq_g, zeros, zeros, zeros], axis=1)  # (B,8,Np)

    sums = _point_losses(rot_inv.reshape(B, 9).astype(jnp.float32),
                         t_inv.astype(jnp.float32),
                         cen.astype(jnp.float32),
                         pred_in, gt3, gt_aug, ti, tj)
    weuc_sum, euc_sum, man_sum, s1, s2 = (sums[:, 0], sums[:, 1], sums[:, 2],
                                          sums[:, 3], sums[:, 4])

    w = dict(zip(loss_opts, loss_weights))
    total = jnp.float32(0.0)

    if 'WEUC' in loss_opts:
        total = total + jnp.mean(weuc_sum / N) * w['WEUC']
    elif 'EUC' in loss_opts:
        total = total + jnp.mean(euc_sum / N) * w['EUC']
    if 'MANHATTAN' in loss_opts:
        total = total + jnp.mean(man_sum / N) * w['MANHATTAN']
    if 'CHAMP' in loss_opts:
        d1_mean = jnp.sum(s1) / (B * N)
        d2_mean = jnp.sum(s2) / (B * N)
        total = total + 0.5 * (d1_mean + d2_mean) * w['CHAMP']
    if 'CHORDAL' in loss_opts:
        diff = T[:, :3, :3] - gtTR[:, :3, :3]
        chordal = jnp.sqrt(jnp.sum(diff * diff, axis=(1, 2)))
        total = total + w['CHORDAL'] * jnp.mean(chordal)
    if 'GEODESIC' in loss_opts:
        eps = 1e-7
        r_diffs = jnp.einsum('bij,bkj->bik', rot, gtTR[:, :3, :3])  # rot @ gtR^T
        traces = r_diffs[:, 0, 0] + r_diffs[:, 1, 1] + r_diffs[:, 2, 2]
        dists = jnp.arccos(jnp.clip((traces - 1.0) / 2.0, -1.0 + eps, 1.0 - eps))
        total = total + jnp.sum(dists) * w['GEODESIC']
    if 'EUCTR' in loss_opts:
        td = T[:, :3, 3] - gtTR[:, :3, 3]
        total = total + w['EUCTR'] * jnp.sum(jnp.sqrt(jnp.sum(td * td, axis=1)))
    # EMDLoss is always 0 in the reference implementation.
    return total


if __name__ == "__main__":
    key = jax.random.PRNGKey(0)
    B, C, H, W = 2, 4, 16, 16
    ks = jax.random.split(key, 7)

    quat = jax.random.normal(ks[0], (B, 4), jnp.float32)          # predicted rotation (quat)
    trans = 0.1 * jax.random.normal(ks[1], (B, 3), jnp.float32)   # predicted translation
    colorImg = jax.random.normal(ks[2], (B, 3, H, W), jnp.float32)
    lidarImg = 10.0 * jax.random.normal(ks[3], (B, C, H, W), jnp.float32)
    lidarImgGT = 10.0 * jax.random.normal(ks[4], (B, C, H, W), jnp.float32)

    gt_quat = jax.random.normal(ks[5], (B, 4), jnp.float32)
    gt_trans = 0.1 * jax.random.normal(ks[6], (B, 3), jnp.float32)
    gtR = quaternion_to_matrix(gt_quat)
    gtTR = (jnp.zeros((B, 4, 4), jnp.float32)
            .at[:, :3, :3].set(gtR)
            .at[:, :3, 3].set(gt_trans)
            .at[:, 3, 3].set(1.0))
    projMat = jnp.tile(jnp.eye(4, dtype=jnp.float32)[None], (B, 1, 1))

    total = get_loss((quat, trans), colorImg, lidarImg, lidarImgGT, gtTR, projMat)
    jax.block_until_ready(total)
    print("KERNEL_OK")
</pallas_src>

<mosaic_0001>
module attributes {stable_mosaic.version = 11 : i64} {
  func.func @kernel(%arg0: i32, %arg1: i32, %arg2: i32, %arg3: memref<2x9xf32, #tpu.memory_space<smem>>, %arg4: memref<2x3xf32, #tpu.memory_space<smem>>, %arg5: memref<2x3xf32, #tpu.memory_space<smem>>, %arg6: memref<1x4x128xf32, #tpu.memory_space<vmem>>, %arg7: memref<1x3x128xf32, #tpu.memory_space<vmem>>, %arg8: memref<1x2x8x128xf32, #tpu.memory_space<vmem>>, %arg9: memref<1x1x128xf32, #tpu.memory_space<vmem>>, %arg10: memref<8x128xf32, #tpu.memory_space<vmem>>, %arg11: memref<128x128xf32, #tpu.memory_space<vmem>>, %arg12: memref<2x8x128xf32, #tpu.memory_space<vmem>>, %arg13: memref<1x128xf32, #tpu.memory_space<vmem>>) attributes {dimension_semantics = [#tpu.dimension_semantics<parallel>, #tpu.dimension_semantics<arbitrary>, #tpu.dimension_semantics<arbitrary>], iteration_bounds = array<i64: 2, 2, 2>, scalar_prefetch = 0 : i64, scratch_operands = 4 : i64, tpu.core_type = #tpu.core_type<tc>, window_params = [{transform_indices = @transform_0, window_bounds = array<i64: 2, 9>}, {transform_indices = @transform_1, window_bounds = array<i64: 2, 3>}, {transform_indices = @transform_2, window_bounds = array<i64: 2, 3>}, {transform_indices = @transform_3, window_bounds = array<i64: 1, 4, 128>}, {transform_indices = @transform_4, window_bounds = array<i64: 1, 3, 128>}, {transform_indices = @transform_5, window_bounds = array<i64: 1, 2, 8, 128>}, {transform_indices = @transform_6, window_bounds = array<i64: 1, 1, 128>}]} {
    %0 = tpu.iota {dimensions = array<i32: 1>} : vector<1x128xi32>
    %c0_i32 = arith.constant 0 : i32
    %1 = arith.cmpi eq, %arg1, %c0_i32 : i32
    %c0_i32_0 = arith.constant 0 : i32
    %2 = arith.cmpi eq, %arg2, %c0_i32_0 : i32
    %3 = arith.andi %1, %2 : i1
    %4 = arith.extui %3 : i1 to i32
    %c0_i32_1 = arith.constant 0 : i32
    %5 = arith.cmpi ne, %4, %c0_i32_1 : i32
    scf.if %5 {
      %cst_22 = arith.constant 0.000000e+00 : f32
      %68 = vector.broadcast %cst_22 : f32 to vector<1x128xf32>
      %c0_23 = arith.constant 0 : index
      %c0_24 = arith.constant 0 : index
      %69 = vector.load %arg13[%c0_23, %c0_24] : memref<1x128xf32, #tpu.memory_space<vmem>>, vector<1x128xf32>
      tpu.vector_store %arg13[%c0_23, %c0_24], %68 {strides = array<i32>} : memref<1x128xf32, #tpu.memory_space<vmem>>, vector<1x128xf32>,
      %cst_25 = arith.constant 1.000000e+00 : f32
      %70 = vector.broadcast %cst_25 : f32 to vector<1x128xf32>
      %c4 = arith.constant 4 : index
      %c0_26 = arith.constant 0 : index
      %71 = vector.load %arg10[%c4, %c0_26] : memref<8x128xf32, #tpu.memory_space<vmem>>, vector<1x128xf32>
      tpu.vector_store %arg10[%c4, %c0_26], %70 {strides = array<i32>} : memref<8x128xf32, #tpu.memory_space<vmem>>, vector<1x128xf32>,
      %cst_27 = arith.constant 0.000000e+00 : f32
      %72 = vector.broadcast %cst_27 : f32 to vector<3x128xf32>
      %c5 = arith.constant 5 : index
      %c0_28 = arith.constant 0 : index
      %73 = vector.load %arg10[%c5, %c0_28] : memref<8x128xf32, #tpu.memory_space<vmem>>, vector<3x128xf32>
      tpu.vector_store %arg10[%c5, %c0_28], %72 {strides = array<i32>} : memref<8x128xf32, #tpu.memory_space<vmem>>, vector<3x128xf32>,
    } else {
    }
    %c0_i32_2 = arith.constant 0 : i32
    %6 = arith.cmpi eq, %arg2, %c0_i32_2 : i32
    %7 = arith.extui %6 : i1 to i32
    %c0_i32_3 = arith.constant 0 : i32
    %8 = arith.cmpi ne, %7, %c0_i32_3 : i32
    scf.if %8 {
      %c0_22 = arith.constant 0 : index
      %c0_23 = arith.constant 0 : index
      %c0_24 = arith.constant 0 : index
      %68 = vector.load %arg6[%c0_22, %c0_23, %c0_24] : memref<1x4x128xf32, #tpu.memory_space<vmem>>, vector<1x4x128xf32>
      %69 = vector.shape_cast %68 : vector<1x4x128xf32> to vector<4x128xf32>
      %70 = vector.extract_strided_slice %69 {offsets = [0, 0], sizes = [1, 128], strides = [1, 1]} : vector<4x128xf32> to vector<1x128xf32>
      %71 = vector.extract_strided_slice %69 {offsets = [1, 0], sizes = [1, 128], strides = [1, 1]} : vector<4x128xf32> to vector<1x128xf32>
      %72 = vector.extract_strided_slice %69 {offsets = [2, 0], sizes = [1, 128], strides = [1, 1]} : vector<4x128xf32> to vector<1x128xf32>
      %73 = vector.extract_strided_slice %69 {offsets = [3, 0], sizes = [1, 128], strides = [1, 1]} : vector<4x128xf32> to vector<1x128xf32>
      %74 = arith.index_cast %arg0 : i32 to index
      %c0_25 = arith.constant 0 : index
      %75 = memref.load %arg3[%74, %c0_25] : memref<2x9xf32, #tpu.memory_space<smem>>
      %76 = vector.broadcast %75 : f32 to vector<1x128xf32>
      %77 = arith.mulf %76, %70 : vector<1x128xf32>
      %78 = arith.index_cast %arg0 : i32 to index
      %c1 = arith.constant 1 : index
      %79 = memref.load %arg3[%78, %c1] : memref<2x9xf32, #tpu.memory_space<smem>>
      %80 = vector.broadcast %79 : f32 to vector<1x128xf32>
      %81 = arith.mulf %80, %71 : vector<1x128xf32>
      %82 = arith.addf %77, %81 : vector<1x128xf32>
      %83 = arith.index_cast %arg0 : i32 to index
      %c2 = arith.constant 2 : index
      %84 = memref.load %arg3[%83, %c2] : memref<2x9xf32, #tpu.memory_space<smem>>
      %85 = vector.broadcast %84 : f32 to vector<1x128xf32>
      %86 = arith.mulf %85, %72 : vector<1x128xf32>
      %87 = arith.addf %82, %86 : vector<1x128xf32>
      %88 = arith.index_cast %arg0 : i32 to index
      %c0_26 = arith.constant 0 : index
      %89 = memref.load %arg4[%88, %c0_26] : memref<2x3xf32, #tpu.memory_space<smem>>
      %90 = vector.broadcast %89 : f32 to vector<1x128xf32>
      %91 = arith.addf %87, %90 : vector<1x128xf32>
      %92 = arith.index_cast %arg0 : i32 to index
      %c3 = arith.constant 3 : index
      %93 = memref.load %arg3[%92, %c3] : memref<2x9xf32, #tpu.memory_space<smem>>
      %94 = vector.broadcast %93 : f32 to vector<1x128xf32>
      %95 = arith.mulf %94, %70 : vector<1x128xf32>
      %96 = arith.index_cast %arg0 : i32 to index
      %c4 = arith.constant 4 : index
      %97 = memref.load %arg3[%96, %c4] : memref<2x9xf32, #tpu.memory_space<smem>>
      %98 = vector.broadcast %97 : f32 to vector<1x128xf32>
      %99 = arith.mulf %98, %71 : vector<1x128xf32>
      %100 = arith.addf %95, %99 : vector<1x128xf32>
      %101 = arith.index_cast %arg0 : i32 to index
      %c5 = arith.constant 5 : index
      %102 = memref.load %arg3[%101, %c5] : memref<2x9xf32, #tpu.memory_space<smem>>
      %103 = vector.broadcast %102 : f32 to vector<1x128xf32>
      %104 = arith.mulf %103, %72 : vector<1x128xf32>
      %105 = arith.addf %100, %104 : vector<1x128xf32>
      %106 = arith.index_cast %arg0 : i32 to index
      %c1_27 = arith.constant 1 : index
      %107 = memref.load %arg4[%106, %c1_27] : memref<2x3xf32, #tpu.memory_space<smem>>
      %108 = vector.broadcast %107 : f32 to vector<1x128xf32>
      %109 = arith.addf %105, %108 : vector<1x128xf32>
      %110 = arith.index_cast %arg0 : i32 to index
      %c6 = arith.constant 6 : index
      %111 = memref.load %arg3[%110, %c6] : memref<2x9xf32, #tpu.memory_space<smem>>
      %112 = vector.broadcast %111 : f32 to vector<1x128xf32>
      %113 = arith.mulf %112, %70 : vector<1x128xf32>
      %114 = arith.index_cast %arg0 : i32 to index
      %c7 = arith.constant 7 : index
      %115 = memref.load %arg3[%114, %c7] : memref<2x9xf32, #tpu.memory_space<smem>>
      %116 = vector.broadcast %115 : f32 to vector<1x128xf32>
      %117 = arith.mulf %116, %71 : vector<1x128xf32>
      %118 = arith.addf %113, %117 : vector<1x128xf32>
      %119 = arith.index_cast %arg0 : i32 to index
      %c8 = arith.constant 8 : index
      %120 = memref.load %arg3[%119, %c8] : memref<2x9xf32, #tpu.memory_space<smem>>
      %121 = vector.broadcast %120 : f32 to vector<1x128xf32>
      %122 = arith.mulf %121, %72 : vector<1x128xf32>
      %123 = arith.addf %118, %122 : vector<1x128xf32>
      %124 = arith.index_cast %arg0 : i32 to index
      %c2_28 = arith.constant 2 : index
      %125 = memref.load %arg4[%124, %c2_28] : memref<2x3xf32, #tpu.memory_space<smem>>
      %126 = vector.broadcast %125 : f32 to vector<1x128xf32>
      %127 = arith.addf %123, %126 : vector<1x128xf32>
      %c0_29 = arith.constant 0 : index
      %c0_30 = arith.constant 0 : index
      %c0_31 = arith.constant 0 : index
      %128 = vector.load %arg7[%c0_29, %c0_30, %c0_31] : memref<1x3x128xf32, #tpu.memory_space<vmem>>, vector<1x3x128xf32>
      %129 = vector.shape_cast %128 : vector<1x3x128xf32> to vector<3x128xf32>
      %130 = vector.extract_strided_slice %129 {offsets = [0, 0], sizes = [1, 128], strides = [1, 1]} : vector<3x128xf32> to vector<1x128xf32>
      %131 = vector.extract_strided_slice %129 {offsets = [1, 0], sizes = [1, 128], strides = [1, 1]} : vector<3x128xf32> to vector<1x128xf32>
      %132 = vector.extract_strided_slice %129 {offsets = [2, 0], sizes = [1, 128], strides = [1, 1]} : vector<3x128xf32> to vector<1x128xf32>
      %133 = arith.index_cast %arg0 : i32 to index
      %c0_32 = arith.constant 0 : index
      %134 = memref.load %arg5[%133, %c0_32] : memref<2x3xf32, #tpu.memory_space<smem>>
      %135 = vector.broadcast %134 : f32 to vector<1x128xf32>
      %136 = arith.subf %91, %135 : vector<1x128xf32>
      %137 = arith.index_cast %arg0 : i32 to index
      %c1_33 = arith.constant 1 : index
      %138 = memref.load %arg5[%137, %c1_33] : memref<2x3xf32, #tpu.memory_space<smem>>
      %139 = vector.broadcast %138 : f32 to vector<1x128xf32>
      %140 = arith.subf %109, %139 : vector<1x128xf32>
      %141 = arith.index_cast %arg0 : i32 to index
      %c2_34 = arith.constant 2 : index
      %142 = memref.load %arg5[%141, %c2_34] : memref<2x3xf32, #tpu.memory_space<smem>>
      %143 = vector.broadcast %142 : f32 to vector<1x128xf32>
      %144 = arith.subf %127, %143 : vector<1x128xf32>
      %145 = arith.subf %130, %136 : vector<1x128xf32>
      %146 = arith.subf %131, %140 : vector<1x128xf32>
      %147 = arith.subf %132, %144 : vector<1x128xf32>
      %148 = arith.mulf %145, %145 : vector<1x128xf32>
      %149 = arith.mulf %146, %146 : vector<1x128xf32>
      %150 = arith.addf %148, %149 : vector<1x128xf32>
      %151 = arith.mulf %147, %147 : vector<1x128xf32>
      %152 = arith.addf %150, %151 : vector<1x128xf32>
      %153 = math.sqrt %152 : vector<1x128xf32>
      %154 = arith.mulf %153, %73 : vector<1x128xf32>
      %155 = math.absf %145 : vector<1x128xf32>
      %156 = math.absf %146 : vector<1x128xf32>
      %157 = arith.addf %155, %156 : vector<1x128xf32>
      %158 = math.absf %147 : vector<1x128xf32>
      %159 = arith.addf %157, %158 : vector<1x128xf32>
      %160 = arith.mulf %159, %73 : vector<1x128xf32>
      %161 = arith.mulf %91, %91 : vector<1x128xf32>
      %162 = arith.mulf %109, %109 : vector<1x128xf32>
      %163 = arith.addf %161, %162 : vector<1x128xf32>
      %164 = arith.mulf %127, %127 : vector<1x128xf32>
      %165 = arith.addf %163, %164 : vector<1x128xf32>
      %166 = math.sqrt %165 : vector<1x128xf32>
      %cst_35 = arith.constant 1.000000e+00 : f32
      %167 = vector.broadcast %cst_35 : f32 to vector<1x128xf32>
      %168 = arith.cmpf olt, %166, %167 : vector<1x128xf32>
      %cst_36 = arith.constant 9.99999974E-6 : f32
      %169 = vector.broadcast %cst_36 : f32 to vector<1x128xf32>
      %170 = arith.select %168, %169, %166 : vector<1x128xi1>, vector<1x128xf32>
      %cst_37 = arith.constant 8.000000e+01 : f32
      %171 = vector.broadcast %cst_37 : f32 to vector<1x128xf32>
      %172 = arith.divf %171, %170 : vector<1x128xf32>
      %cst_38 = arith.constant 0.000000e+00 : f32
      %173 = vector.broadcast %cst_38 : f32 to vector<1x128xf32>
      %174 = arith.select %168, %173, %172 : vector<1x128xi1>, vector<1x128xf32>
      %c0_i32_39 = arith.constant 0 : i32
      %175 = vector.broadcast %c0_i32_39 : i32 to vector<1x128xi32>
      %176 = arith.cmpi eq, %0, %175 : vector<1x128xi32>
      %177 = arith.mulf %154, %174 : vector<1x128xf32>
      %178 = vector.shape_cast %177 : vector<1x128xf32> to vector<1x1x128xf32>
      %cst_40 = arith.constant dense<0.000000e+00> : vector<1xf32>
      %179 = vector.multi_reduction <add>, %178, %cst_40 [1, 2] : vector<1x1x128xf32> to vector<1xf32>
      %180 = vector.shape_cast %179 : vector<1xf32> to vector<1x1x1xf32>
      %181 = vector.extract %180[0, 0, 0] : f32 from vector<1x1x1xf32>
      %182 = vector.broadcast %181 : f32 to vector<1x1xf32>
      %cst_41 = arith.constant 0.000000e+00 : f32
      %183 = vector.shape_cast %182 : vector<1x1xf32> to vector<1x1xf32>
      %184 = vector.broadcast %183 : vector<1x1xf32> to vector<1x128xf32>
      %185 = vector.broadcast %cst_41 : f32 to vector<1x128xf32>
      %186 = arith.select %176, %184, %185 : vector<1x128xi1>, vector<1x128xf32>
      %c1_i32_42 = arith.constant 1 : i32
      %187 = vector.broadcast %c1_i32_42 : i32 to vector<1x128xi32>
      %188 = arith.cmpi eq, %0, %187 : vector<1x128xi32>
      %189 = vector.shape_cast %154 : vector<1x128xf32> to vector<1x1x128xf32>
      %cst_43 = arith.constant dense<0.000000e+00> : vector<1xf32>
      %190 = vector.multi_reduction <add>, %189, %cst_43 [1, 2] : vector<1x1x128xf32> to vector<1xf32>
      %191 = vector.shape_cast %190 : vector<1xf32> to vector<1x1x1xf32>
      %192 = vector.extract %191[0, 0, 0] : f32 from vector<1x1x1xf32>
      %193 = vector.broadcast %192 : f32 to vector<1x1xf32>
      %cst_44 = arith.constant 0.000000e+00 : f32
      %194 = vector.shape_cast %193 : vector<1x1xf32> to vector<1x1xf32>
      %195 = vector.broadcast %194 : vector<1x1xf32> to vector<1x128xf32>
      %196 = vector.broadcast %cst_44 : f32 to vector<1x128xf32>
      %197 = arith.select %188, %195, %196 : vector<1x128xi1>, vector<1x128xf32>
      %198 = arith.addf %186, %197 : vector<1x128xf32>
      %c2_i32 = arith.constant 2 : i32
      %199 = vector.broadcast %c2_i32 : i32 to vector<1x128xi32>
      %200 = arith.cmpi eq, %0, %199 : vector<1x128xi32>
      %201 = vector.shape_cast %160 : vector<1x128xf32> to vector<1x1x128xf32>
      %cst_45 = arith.constant dense<0.000000e+00> : vector<1xf32>
      %202 = vector.multi_reduction <add>, %201, %cst_45 [1, 2] : vector<1x1x128xf32> to vector<1xf32>
      %203 = vector.shape_cast %202 : vector<1xf32> to vector<1x1x1xf32>
      %204 = vector.extract %203[0, 0, 0] : f32 from vector<1x1x1xf32>
      %205 = vector.broadcast %204 : f32 to vector<1x1xf32>
      %cst_46 = arith.constant 0.000000e+00 : f32
      %206 = vector.shape_cast %205 : vector<1x1xf32> to vector<1x1xf32>
      %207 = vector.broadcast %206 : vector<1x1xf32> to vector<1x128xf32>
      %208 = vector.broadcast %cst_46 : f32 to vector<1x128xf32>
      %209 = arith.select %200, %207, %208 : vector<1x128xi1>, vector<1x128xf32>
      %210 = arith.addf %198, %209 : vector<1x128xf32>
      %c0_47 = arith.constant 0 : index
      %c0_48 = arith.constant 0 : index
      %211 = vector.load %arg13[%c0_47, %c0_48] : memref<1x128xf32, #tpu.memory_space<vmem>>, vector<1x128xf32>
      %212 = arith.addf %211, %210 : vector<1x128xf32>
      %c0_49 = arith.constant 0 : index
      %c0_50 = arith.constant 0 : index
      %213 = vector.load %arg13[%c0_49, %c0_50] : memref<1x128xf32, #tpu.memory_space<vmem>>, vector<1x128xf32>
      tpu.vector_store %arg13[%c0_49, %c0_50], %212 {strides = array<i32>} : memref<1x128xf32, #tpu.memory_space<vmem>>, vector<1x128xf32>,
      %cst_51 = arith.constant -2.000000e+00 : f32
      %214 = vector.broadcast %cst_51 : f32 to vector<1x128xf32>
      %215 = arith.mulf %214, %136 : vector<1x128xf32>
      %c0_52 = arith.constant 0 : index
      %c0_53 = arith.constant 0 : index
      %216 = vector.load %arg10[%c0_52, %c0_53] : memref<8x128xf32, #tpu.memory_space<vmem>>, vector<1x128xf32>
      tpu.vector_store %arg10[%c0_52, %c0_53], %215 {strides = array<i32>} : memref<8x128xf32, #tpu.memory_space<vmem>>, vector<1x128xf32>,
      %cst_54 = arith.constant -2.000000e+00 : f32
      %217 = vector.broadcast %cst_54 : f32 to vector<1x128xf32>
      %218 = arith.mulf %217, %140 : vector<1x128xf32>
      %c1_55 = arith.constant 1 : index
      %c0_56 = arith.constant 0 : index
      %219 = vector.load %arg10[%c1_55, %c0_56] : memref<8x128xf32, #tpu.memory_space<vmem>>, vector<1x128xf32>
      tpu.vector_store %arg10[%c1_55, %c0_56], %218 {strides = array<i32>} : memref<8x128xf32, #tpu.memory_space<vmem>>, vector<1x128xf32>,
      %cst_57 = arith.constant -2.000000e+00 : f32
      %220 = vector.broadcast %cst_57 : f32 to vector<1x128xf32>
      %221 = arith.mulf %220, %144 : vector<1x128xf32>
      %c2_58 = arith.constant 2 : index
      %c0_59 = arith.constant 0 : index
      %222 = vector.load %arg10[%c2_58, %c0_59] : memref<8x128xf32, #tpu.memory_space<vmem>>, vector<1x128xf32>
      tpu.vector_store %arg10[%c2_58, %c0_59], %221 {strides = array<i32>} : memref<8x128xf32, #tpu.memory_space<vmem>>, vector<1x128xf32>,
      %223 = arith.mulf %136, %136 : vector<1x128xf32>
      %224 = arith.mulf %140, %140 : vector<1x128xf32>
      %225 = arith.addf %223, %224 : vector<1x128xf32>
      %226 = arith.mulf %144, %144 : vector<1x128xf32>
      %227 = arith.addf %225, %226 : vector<1x128xf32>
      %cst_60 = arith.constant 1.000000e+00 : f32
      %228 = vector.broadcast %cst_60 : f32 to vector<1x128xf32>
      %229 = arith.subf %228, %73 : vector<1x128xf32>
      %cst_61 = arith.constant 1.000000e+30 : f32
      %230 = vector.broadcast %cst_61 : f32 to vector<1x128xf32>
      %231 = arith.mulf %229, %230 : vector<1x128xf32>
      %232 = arith.addf %227, %231 : vector<1x128xf32>
      %c3_62 = arith.constant 3 : index
      %c0_63 = arith.constant 0 : index
      %233 = vector.load %arg10[%c3_62, %c0_63] : memref<8x128xf32, #tpu.memory_space<vmem>>, vector<1x128xf32>
      tpu.vector_store %arg10[%c3_62, %c0_63], %232 {strides = array<i32>} : memref<8x128xf32, #tpu.memory_space<vmem>>, vector<1x128xf32>,
    } else {
    }
    %c0 = arith.constant 0 : index
    %9 = arith.index_cast %arg2 : i32 to index
    %c0_4 = arith.constant 0 : index
    %c0_5 = arith.constant 0 : index
    %10 = vector.load %arg8[%c0, %9, %c0_4, %c0_5] : memref<1x2x8x128xf32, #tpu.memory_space<vmem>>, vector<1x1x8x128xf32>
    %11 = vector.shape_cast %10 : vector<1x1x8x128xf32> to vector<8x128xf32>
    %c0_6 = arith.constant 0 : index
    %c0_7 = arith.constant 0 : index
    %12 = vector.load %arg10[%c0_6, %c0_7] : memref<8x128xf32, #tpu.memory_space<vmem>>, vector<8x128xf32>
    %cst = arith.constant dense<0.000000e+00> : vector<128x128xf32>
    %13 = tpu.matmul %12, %11, %cst {dimension_numbers = #tpu.dot_dimension_numbers<[0], [0], [1], [1], [0, 1, 1, 1], [], []>} : vector<8x128xf32>, vector<8x128xf32>, vector<128x128xf32> -> vector<128x128xf32>
    %14 = vector.extract_strided_slice %13 {offsets = [0, 0], sizes = [8, 128], strides = [1, 1]} : vector<128x128xf32> to vector<8x128xf32>
    %15 = vector.extract_strided_slice %13 {offsets = [8, 0], sizes = [8, 128], strides = [1, 1]} : vector<128x128xf32> to vector<8x128xf32>
    %16 = arith.minimumf %14, %15 : vector<8x128xf32>
    %17 = vector.extract_strided_slice %13 {offsets = [16, 0], sizes = [8, 128], strides = [1, 1]} : vector<128x128xf32> to vector<8x128xf32>
    %18 = arith.minimumf %16, %17 : vector<8x128xf32>
    %19 = vector.extract_strided_slice %13 {offsets = [24, 0], sizes = [8, 128], strides = [1, 1]} : vector<128x128xf32> to vector<8x128xf32>
    %20 = arith.minimumf %18, %19 : vector<8x128xf32>
    %21 = vector.extract_strided_slice %13 {offsets = [32, 0], sizes = [8, 128], strides = [1, 1]} : vector<128x128xf32> to vector<8x128xf32>
    %22 = arith.minimumf %20, %21 : vector<8x128xf32>
    %23 = vector.extract_strided_slice %13 {offsets = [40, 0], sizes = [8, 128], strides = [1, 1]} : vector<128x128xf32> to vector<8x128xf32>
    %24 = arith.minimumf %22, %23 : vector<8x128xf32>
    %25 = vector.extract_strided_slice %13 {offsets = [48, 0], sizes = [8, 128], strides = [1, 1]} : vector<128x128xf32> to vector<8x128xf32>
    %26 = arith.minimumf %24, %25 : vector<8x128xf32>
    %27 = vector.extract_strided_slice %13 {offsets = [56, 0], sizes = [8, 128], strides = [1, 1]} : vector<128x128xf32> to vector<8x128xf32>
    %28 = arith.minimumf %26, %27 : vector<8x128xf32>
    %29 = vector.extract_strided_slice %13 {offsets = [64, 0], sizes = [8, 128], strides = [1, 1]} : vector<128x128xf32> to vector<8x128xf32>
    %30 = arith.minimumf %28, %29 : vector<8x128xf32>
    %31 = vector.extract_strided_slice %13 {offsets = [72, 0], sizes = [8, 128], strides = [1, 1]} : vector<128x128xf32> to vector<8x128xf32>
    %32 = arith.minimumf %30, %31 : vector<8x128xf32>
    %33 = vector.extract_strided_slice %13 {offsets = [80, 0], sizes = [8, 128], strides = [1, 1]} : vector<128x128xf32> to vector<8x128xf32>
    %34 = arith.minimumf %32, %33 : vector<8x128xf32>
    %35 = vector.extract_strided_slice %13 {offsets = [88, 0], sizes = [8, 128], strides = [1, 1]} : vector<128x128xf32> to vector<8x128xf32>
    %36 = arith.minimumf %34, %35 : vector<8x128xf32>
    %37 = vector.extract_strided_slice %13 {offsets = [96, 0], sizes = [8, 128], strides = [1, 1]} : vector<128x128xf32> to vector<8x128xf32>
    %38 = arith.minimumf %36, %37 : vector<8x128xf32>
    %39 = vector.extract_strided_slice %13 {offsets = [104, 0], sizes = [8, 128], strides = [1, 1]} : vector<128x128xf32> to vector<8x128xf32>
    %40 = arith.minimumf %38, %39 : vector<8x128xf32>
    %41 = vector.extract_strided_slice %13 {offsets = [112, 0], sizes = [8, 128], strides = [1, 1]} : vector<128x128xf32> to vector<8x128xf32>
    %42 = arith.minimumf %40, %41 : vector<8x128xf32>
    %43 = vector.extract_strided_slice %13 {offsets = [120, 0], sizes = [8, 128], strides = [1, 1]} : vector<128x128xf32> to vector<8x128xf32>
    %44 = arith.minimumf %42, %43 : vector<8x128xf32>
    %c0_i32_8 = arith.constant 0 : i32
    %45 = arith.cmpi eq, %arg2, %c0_i32_8 : i32
    %46 = arith.extui %45 : i1 to i32
    %c0_i32_9 = arith.constant 0 : i32
    %47 = arith.cmpi ne, %46, %c0_i32_9 : i32
    scf.if %47 {
      %c0_22 = arith.constant 0 : index
      %c0_23 = arith.constant 0 : index
      %68 = vector.load %arg11[%c0_22, %c0_23] : memref<128x128xf32, #tpu.memory_space<vmem>>, vector<128x128xf32>
      tpu.vector_store %arg11[%c0_22, %c0_23], %13 {strides = array<i32>} : memref<128x128xf32, #tpu.memory_space<vmem>>, vector<128x128xf32>,
    } else {
    }
    %c0_i32_10 = arith.constant 0 : i32
    %48 = arith.cmpi ne, %arg2, %c0_i32_10 : i32
    %49 = arith.extui %48 : i1 to i32
    %c0_i32_11 = arith.constant 0 : i32
    %50 = arith.cmpi ne, %49, %c0_i32_11 : i32
    scf.if %50 {
      %c0_22 = arith.constant 0 : index
      %c0_23 = arith.constant 0 : index
      %68 = vector.load %arg11[%c0_22, %c0_23] : memref<128x128xf32, #tpu.memory_space<vmem>>, vector<128x128xf32>
      %69 = arith.minimumf %68, %13 : vector<128x128xf32>
      %c0_24 = arith.constant 0 : index
      %c0_25 = arith.constant 0 : index
      %70 = vector.load %arg11[%c0_24, %c0_25] : memref<128x128xf32, #tpu.memory_space<vmem>>, vector<128x128xf32>
      tpu.vector_store %arg11[%c0_24, %c0_25], %69 {strides = array<i32>} : memref<128x128xf32, #tpu.memory_space<vmem>>, vector<128x128xf32>,
    } else {
    }
    %c0_i32_12 = arith.constant 0 : i32
    %51 = arith.cmpi eq, %arg1, %c0_i32_12 : i32
    %52 = arith.extui %51 : i1 to i32
    %c0_i32_13 = arith.constant 0 : i32
    %53 = arith.cmpi ne, %52, %c0_i32_13 : i32
    scf.if %53 {
      %68 = arith.index_cast %arg2 : i32 to index
      %c0_22 = arith.constant 0 : index
      %c0_23 = arith.constant 0 : index
      %69 = vector.load %arg12[%68, %c0_22, %c0_23] : memref<2x8x128xf32, #tpu.memory_space<vmem>>, vector<1x8x128xf32>
      %70 = vector.shape_cast %69 : vector<1x8x128xf32> to vector<8x128xf32>
      %71 = vector.shape_cast %44 : vector<8x128xf32> to vector<1x8x128xf32>
      tpu.vector_store %arg12[%68, %c0_22, %c0_23], %71 {strides = array<i32>} : memref<2x8x128xf32, #tpu.memory_space<vmem>>, vector<1x8x128xf32>,
    } else {
    }
    %c0_i32_14 = arith.constant 0 : i32
    %54 = arith.cmpi ne, %arg1, %c0_i32_14 : i32
    %55 = arith.extui %54 : i1 to i32
    %c0_i32_15 = arith.constant 0 : i32
    %56 = arith.cmpi ne, %55, %c0_i32_15 : i32
    scf.if %56 {
      %68 = arith.index_cast %arg2 : i32 to index
      %c0_22 = arith.constant 0 : index
      %c0_23 = arith.constant 0 : index
      %69 = vector.load %arg12[%68, %c0_22, %c0_23] : memref<2x8x128xf32, #tpu.memory_space<vmem>>, vector<1x8x128xf32>
      %70 = vector.shape_cast %69 : vector<1x8x128xf32> to vector<8x128xf32>
      %71 = arith.minimumf %70, %44 : vector<8x128xf32>
      %72 = arith.index_cast %arg2 : i32 to index
      %c0_24 = arith.constant 0 : index
      %c0_25 = arith.constant 0 : index
      %73 = vector.load %arg12[%72, %c0_24, %c0_25] : memref<2x8x128xf32, #tpu.memory_space<vmem>>, vector<1x8x128xf32>
      %74 = vector.shape_cast %73 : vector<1x8x128xf32> to vector<8x128xf32>
      %75 = vector.shape_cast %71 : vector<8x128xf32> to vector<1x8x128xf32>
      tpu.vector_store %arg12[%72, %c0_24, %c0_25], %75 {strides = array<i32>} : memref<2x8x128xf32, #tpu.memory_space<vmem>>, vector<1x8x128xf32>,
    } else {
    }
    %c1_i32 = arith.constant 1 : i32
    %57 = arith.cmpi eq, %arg2, %c1_i32 : i32
    %58 = arith.extui %57 : i1 to i32
    %c0_i32_16 = arith.constant 0 : i32
    %59 = arith.cmpi ne, %58, %c0_i32_16 : i32
    scf.if %59 {
      %c0_22 = arith.constant 0 : index
      %c0_23 = arith.constant 0 : index
      %68 = vector.load %arg11[%c0_22, %c0_23] : memref<128x128xf32, #tpu.memory_space<vmem>>, vector<128x128xf32>
      %cst_24 = arith.constant dense<0x7F800000> : vector<128xf32>
      %69 = vector.multi_reduction <minimumf>, %68, %cst_24 [1] : vector<128x128xf32> to vector<128xf32>
      %70 = vector.shape_cast %69 : vector<128xf32> to vector<128x1xf32>
      %cst_25 = arith.constant 0.000000e+00 : f32
      %71 = vector.broadcast %cst_25 : f32 to vector<128x1xf32>
      %72 = arith.maximumf %70, %71 : vector<128x1xf32>
      %cst_26 = arith.constant 1.000000e+20 : f32
      %73 = vector.broadcast %cst_26 : f32 to vector<128x1xf32>
      %74 = arith.cmpf ogt, %72, %73 : vector<128x1xf32>
      %75 = math.sqrt %72 : vector<128x1xf32>
      %cst_27 = arith.constant 0.000000e+00 : f32
      %76 = vector.broadcast %cst_27 : f32 to vector<128x1xf32>
      %77 = arith.select %74, %76, %75 : vector<128x1xi1>, vector<128x1xf32>
      %c0_28 = arith.constant 0 : index
      %c0_29 = arith.constant 0 : index
      %78 = vector.load %arg13[%c0_28, %c0_29] : memref<1x128xf32, #tpu.memory_space<vmem>>, vector<1x128xf32>
      %c3_i32 = arith.constant 3 : i32
      %79 = vector.broadcast %c3_i32 : i32 to vector<1x128xi32>
      %80 = arith.cmpi eq, %0, %79 : vector<1x128xi32>
      %81 = vector.shape_cast %77 : vector<128x1xf32> to vector<1x128x1xf32>
      %cst_30 = arith.constant dense<0.000000e+00> : vector<1xf32>
      %82 = vector.multi_reduction <add>, %81, %cst_30 [1, 2] : vector<1x128x1xf32> to vector<1xf32>
      %83 = vector.shape_cast %82 : vector<1xf32> to vector<1x1x1xf32>
      %84 = vector.extract %83[0, 0, 0] : f32 from vector<1x1x1xf32>
      %85 = vector.broadcast %84 : f32 to vector<1x1xf32>
      %cst_31 = arith.constant 0.000000e+00 : f32
      %86 = vector.shape_cast %85 : vector<1x1xf32> to vector<1x1xf32>
      %87 = vector.broadcast %86 : vector<1x1xf32> to vector<1x128xf32>
      %88 = vector.broadcast %cst_31 : f32 to vector<1x128xf32>
      %89 = arith.select %80, %87, %88 : vector<1x128xi1>, vector<1x128xf32>
      %90 = arith.addf %78, %89 : vector<1x128xf32>
      %c0_32 = arith.constant 0 : index
      %c0_33 = arith.constant 0 : index
      %91 = vector.load %arg13[%c0_32, %c0_33] : memref<1x128xf32, #tpu.memory_space<vmem>>, vector<1x128xf32>
      tpu.vector_store %arg13[%c0_32, %c0_33], %90 {strides = array<i32>} : memref<1x128xf32, #tpu.memory_space<vmem>>, vector<1x128xf32>,
    } else {
    }
    %c1_i32_17 = arith.constant 1 : i32
    %60 = arith.cmpi eq, %arg1, %c1_i32_17 : i32
    %61 = arith.extui %60 : i1 to i32
    %c0_i32_18 = arith.constant 0 : i32
    %62 = arith.cmpi ne, %61, %c0_i32_18 : i32
    scf.if %62 {
      %68 = arith.index_cast %arg2 : i32 to index
      %c0_22 = arith.constant 0 : index
      %c0_23 = arith.constant 0 : index
      %69 = vector.load %arg12[%68, %c0_22, %c0_23] : memref<2x8x128xf32, #tpu.memory_space<vmem>>, vector<1x8x128xf32>
      %70 = vector.shape_cast %69 : vector<1x8x128xf32> to vector<8x128xf32>
      %cst_24 = arith.constant dense<0x7F800000> : vector<128xf32>
      %71 = vector.multi_reduction <minimumf>, %70, %cst_24 [0] : vector<8x128xf32> to vector<128xf32>
      %72 = vector.shape_cast %71 : vector<128xf32> to vector<1x128xf32>
      %cst_25 = arith.constant 0.000000e+00 : f32
      %73 = vector.broadcast %cst_25 : f32 to vector<1x128xf32>
      %74 = arith.maximumf %72, %73 : vector<1x128xf32>
      %cst_26 = arith.constant 1.000000e+20 : f32
      %75 = vector.broadcast %cst_26 : f32 to vector<1x128xf32>
      %76 = arith.cmpf ogt, %74, %75 : vector<1x128xf32>
      %77 = math.sqrt %74 : vector<1x128xf32>
      %cst_27 = arith.constant 0.000000e+00 : f32
      %78 = vector.broadcast %cst_27 : f32 to vector<1x128xf32>
      %79 = arith.select %76, %78, %77 : vector<1x128xi1>, vector<1x128xf32>
      %c0_28 = arith.constant 0 : index
      %c0_29 = arith.constant 0 : index
      %80 = vector.load %arg13[%c0_28, %c0_29] : memref<1x128xf32, #tpu.memory_space<vmem>>, vector<1x128xf32>
      %c4_i32 = arith.constant 4 : i32
      %81 = vector.broadcast %c4_i32 : i32 to vector<1x128xi32>
      %82 = arith.cmpi eq, %0, %81 : vector<1x128xi32>
      %83 = vector.shape_cast %79 : vector<1x128xf32> to vector<1x1x128xf32>
      %cst_30 = arith.constant dense<0.000000e+00> : vector<1xf32>
      %84 = vector.multi_reduction <add>, %83, %cst_30 [1, 2] : vector<1x1x128xf32> to vector<1xf32>
      %85 = vector.shape_cast %84 : vector<1xf32> to vector<1x1x1xf32>
      %86 = vector.extract %85[0, 0, 0] : f32 from vector<1x1x1xf32>
      %87 = vector.broadcast %86 : f32 to vector<1x1xf32>
      %cst_31 = arith.constant 0.000000e+00 : f32
      %88 = vector.shape_cast %87 : vector<1x1xf32> to vector<1x1xf32>
      %89 = vector.broadcast %88 : vector<1x1xf32> to vector<1x128xf32>
      %90 = vector.broadcast %cst_31 : f32 to vector<1x128xf32>
      %91 = arith.select %82, %89, %90 : vector<1x128xi1>, vector<1x128xf32>
      %92 = arith.addf %80, %91 : vector<1x128xf32>
      %c0_32 = arith.constant 0 : index
      %c0_33 = arith.constant 0 : index
      %93 = vector.load %arg13[%c0_32, %c0_33] : memref<1x128xf32, #tpu.memory_space<vmem>>, vector<1x128xf32>
      tpu.vector_store %arg13[%c0_32, %c0_33], %92 {strides = array<i32>} : memref<1x128xf32, #tpu.memory_space<vmem>>, vector<1x128xf32>,
    } else {
    }
    %c1_i32_19 = arith.constant 1 : i32
    %63 = arith.cmpi eq, %arg1, %c1_i32_19 : i32
    %c1_i32_20 = arith.constant 1 : i32
    %64 = arith.cmpi eq, %arg2, %c1_i32_20 : i32
    %65 = arith.andi %63, %64 : i1
    %66 = arith.extui %65 : i1 to i32
    %c0_i32_21 = arith.constant 0 : i32
    %67 = arith.cmpi ne, %66, %c0_i32_21 : i32
    scf.if %67 {
      %c0_22 = arith.constant 0 : index
      %c0_23 = arith.constant 0 : index
      %68 = vector.load %arg13[%c0_22, %c0_23] : memref<1x128xf32, #tpu.memory_space<vmem>>, vector<1x128xf32>
      %c0_24 = arith.constant 0 : index
      %c0_25 = arith.constant 0 : index
      %c0_26 = arith.constant 0 : index
      %69 = vector.load %arg9[%c0_24, %c0_25, %c0_26] : memref<1x1x128xf32, #tpu.memory_space<vmem>>, vector<1x1x128xf32>
      %70 = vector.shape_cast %69 : vector<1x1x128xf32> to vector<1x128xf32>
      %71 = vector.shape_cast %68 : vector<1x128xf32> to vector<1x1x128xf32>
      tpu.vector_store %arg9[%c0_24, %c0_25, %c0_26], %71 {strides = array<i32>} : memref<1x1x128xf32, #tpu.memory_space<vmem>>, vector<1x1x128xf32>,
    } else {
    }
    return
  }
  func.func @transform_0(%arg0: i32, %arg1: i32, %arg2: i32) -> (i32, i32) {
    %c0_i32 = arith.constant 0 : i32
    %c0_i32_0 = arith.constant 0 : i32
    %c0_i32_1 = arith.constant 0 : i32
    return %c0_i32, %c0_i32_0 : i32, i32
  }
  func.func @transform_1(%arg0: i32, %arg1: i32, %arg2: i32) -> (i32, i32) {
    %c0_i32 = arith.constant 0 : i32
    %c0_i32_0 = arith.constant 0 : i32
    %c0_i32_1 = arith.constant 0 : i32
    return %c0_i32, %c0_i32_0 : i32, i32
  }
  func.func @transform_2(%arg0: i32, %arg1: i32, %arg2: i32) -> (i32, i32) {
    %c0_i32 = arith.constant 0 : i32
    %c0_i32_0 = arith.constant 0 : i32
    %c0_i32_1 = arith.constant 0 : i32
    return %c0_i32, %c0_i32_0 : i32, i32
  }
  func.func @transform_3(%arg0: i32, %arg1: i32, %arg2: i32) -> (i32, i32, i32) {
    %c0_i32 = arith.constant 0 : i32
    %c0_i32_0 = arith.constant 0 : i32
    return %arg0, %c0_i32, %arg1 : i32, i32, i32
  }
  func.func @transform_4(%arg0: i32, %arg1: i32, %arg2: i32) -> (i32, i32, i32) {
    %c0_i32 = arith.constant 0 : i32
    %c0_i32_0 = arith.constant 0 : i32
    return %arg0, %c0_i32, %arg1 : i32, i32, i32
  }
  func.func @transform_5(%arg0: i32, %arg1: i32, %arg2: i32) -> (i32, i32, i32, i32) {
    %c0_i32 = arith.constant 0 : i32
    %c0_i32_0 = arith.constant 0 : i32
    %c0_i32_1 = arith.constant 0 : i32
    %c0_i32_2 = arith.constant 0 : i32
    return %arg0, %c0_i32, %c0_i32_0, %c0_i32_1 : i32, i32, i32, i32
  }
  func.func @transform_6(%arg0: i32, %arg1: i32, %arg2: i32) -> (i32, i32, i32) {
    %c0_i32 = arith.constant 0 : i32
    %c0_i32_0 = arith.constant 0 : i32
    %c0_i32_1 = arith.constant 0 : i32
    return %arg0, %c0_i32, %c0_i32_0 : i32, i32, i32
  }
}

</mosaic_0001>

<llo_original>
// kernel: tpu_custom_call.1
$region0: #{tpu_custom_call.1}
  #allocation0 [shape = 'u32[]', space=smem, size = 0x4, offset = 0x4, fixed_abs, tag = 'smem constant byte address 0x4 - core index']
  #allocation1 [shape = 'u32[144,128]{1,0:T(1,128)}', space=vmem, size = 0x12000, scoped, tag = 'internal scratch']
  #allocation2 [shape = 'f32[8,128]{1,0:T(8,128)}', space=vmem, size = 0x1000, scoped, tag = 'scratch operand']
  #allocation3 [shape = 'f32[128,128]{1,0:T(8,128)}', space=vmem, size = 0x10000, scoped, tag = 'scratch operand']
  #allocation4 [shape = 'f32[2,8,128]{2,1,0:T(8,128)}', space=vmem, size = 0x2000, scoped, tag = 'scratch operand']
  #allocation5 [shape = 'f32[1,128]{1,0:T(1,128)}', space=vmem, size = 0x200, scoped, tag = 'scratch operand']
  %s0 = inlined_call_operand.vmem [shape: f32[2,9], index: 0, kind: input, shape index: {}]
  %s1 = inlined_call_operand.vmem [shape: f32[2,3], index: 1, kind: input, shape index: {}]
  %s2 = inlined_call_operand.vmem [shape: f32[2,3], index: 2, kind: input, shape index: {}]
  %s3 = inlined_call_operand.hbm [shape: f32[2,4,256], index: 3, kind: input, shape index: {}]
  %s4 = inlined_call_operand.vmem [shape: f32[2,3,256], index: 4, kind: input, shape index: {}]
  %s5 = inlined_call_operand.vmem [shape: f32[2,2,8,128], index: 5, kind: input, shape index: {}]
  %s6 = inlined_call_operand.hbm [shape: f32[2,1,128], index: 6, kind: output, shape index: {}]
  %s7 = sld [smem:[#allocation0]]
  $region109: #{tpu_custom_call.1} parent=0
    _
  %s9 = ssub.s32 1, %s7
  %s10 = scalar_select 0, %s9, %s7
  $region1: #{tpu_custom_call.1} parent=0
    #allocation6 [shape = 'u8[1024]{0}', space=smem, size = 0x400, scoped, tag = 'input window, operand 0, single buffered']
    #allocation7 [shape = 's32[2]{0}', space=sflag, size = 0x8, scoped, tag = 'scoped memory for tpu_custom_call.1']
    #allocation8 [shape = 's32[2]{0}', space=sflag, size = 0x8, scoped, tag = 'scoped memory for tpu_custom_call.1']
    #allocation9 [shape = 's32[2]{0}', space=sflag, size = 0x8, scoped, tag = 'scoped memory for tpu_custom_call.1']
    #allocation10 [shape = 'u8[1024]{0}', space=smem, size = 0x400, scoped, tag = 'input window, operand 1, single buffered']
    #allocation11 [shape = 's32[1]{0}', space=sflag, size = 0x4, scoped, tag = 'scoped memory for tpu_custom_call.1']
    #allocation12 [shape = 'u8[1024]{0}', space=smem, size = 0x400, scoped, tag = 'input window, operand 2, single buffered']
    #allocation13 [shape = 'u8[4096]{0}', space=vmem, size = 0x1000, scoped, tag = 'input window, operand 3']
    #allocation14 [shape = 'u8[1024]{0}', space=vmem, size = 0x400, scoped, tag = 'output window, operand 0']
    %11 = vsyncpa [#allocation9], 0
    %12 = vsyncpa [#allocation11], 0
    %13 = vsyncpa [#allocation7], 0
    %s14 = scalar_lea.sflag [#allocation7], 1
    %15 = vsyncpa %s14, 0
    %16 = vsyncpa [#allocation8], 0
    %s17 = scalar_lea.sflag [#allocation8], 1
    %18 = vsyncpa %s17, 0
    loop: start=0, step=1, limit=10
    $region2: #{tpu_custom_call.1} parent=1 // loop_pre_header
      _
    $region3: #{tpu_custom_call.1} parent=1 // loop_header
      %s20 = sphi 0, %s24
      %p21 = scmp.ge.s32.totalorder %s20, 10
      %s27 = sphi 0, %s46
      %s28 = sphi 0, %s42
      %s29 = sphi 0, %s38
      %s30 = sphi 0, %s27
      %s31 = sphi 0, %s28
      %s32 = sphi 0, %s29
      %s33 = sphi 0, %s30
      %s34 = sphi 0, %s31
      %s35 = sphi 0, %s32
      %s47 = sphi 0, %s47
      %s49 = sphi 0, %s47
      %s50 = sphi 0, %s49
      %s64 = sphi 0, %s50
      %s68 = sphi 0, %s68
      %s70 = sphi 0, %s68
      %s71 = sphi 0, %s70
      %s85 = sphi 0, %s71
      %s89 = sphi 0, %s89
      %s91 = sphi 0, %s89
      %s92 = sphi 0, %s91
      %s106 = sphi 0, %s92
      %s114 = sphi 0, %s116
      %s117 = sphi 0, %s114
      %s118 = sphi 0, %s117
      %s134 = sphi 0, %s118
      %s142 = sphi 0, %s144
      %s145 = sphi 0, %s142
      %s146 = sphi 0, %s145
      %s162 = sphi 0, %s146
      %s168 = sphi 0, %s170
      %s171 = sphi 0, %s168
      %s172 = sphi 0, %s171
      %s188 = sphi 0, %s172
      %s194 = sphi 0, %s196
      %s197 = sphi 0, %s194
      %s198 = sphi 0, %s197
      %s214 = sphi 0, %s198
    $region4: #{tpu_custom_call.1} parent=1 // loop_header_branch
      %23 = sbr.rel (%p21) target = $region8
    $region5: #{tpu_custom_call.1} parent=1 // loop_body
      %s25 = ssub.s32 %s20, 1
      %s26 = ssub.s32 %s20, 2
      %s36 = sadd.s32 1, %s29
      %p37 = scmp.ge.s32.totalorder %s36, 2
      %s38 = scalar_select %p37, 0, %s36
      %s39 = sadd.s32 1, %s28
      %s40 = scalar_select %p37, %s39, %s28
      %p41 = scmp.ge.s32.totalorder %s40, 2
      %s42 = scalar_select %p41, 0, %s40
      %s43 = sadd.s32 1, %s27
      %s44 = scalar_select %p41, %s43, %s27
      %p45 = scmp.ge.s32.totalorder %s44, 2
      %s46 = scalar_select %p45, 0, %s44
      %s48 = sadd.s32 %s47, 1
      %p51 = scmp.eq.s32.totalorder %s20, 7
      %p52 = scmp.ne.s32.totalorder %s47, %s49
      %p53 = scmp.eq.s32.totalorder %s20, 0
      %p54 = por %p52, %p53
      %p55 = scmp.ne.s32.totalorder %s47, %s49
      %p56 = scmp.eq.s32.totalorder %s25, 7
      %p57 = por %p55, %p56
      %p58 = scmp.ne.s32.totalorder %s49, %s50
      %p59 = scmp.eq.s32.totalorder %s25, 0
      %p60 = por %p58, %p59
      %p61 = scmp.ne.s32.totalorder %s49, %s50
      %p62 = scmp.eq.s32.totalorder %s26, 7
      %p63 = por %p61, %p62
      %p65 = scmp.ne.s32.totalorder %s50, %s64
      %p66 = scmp.eq.s32.totalorder %s26, 0
      %p67 = por %p65, %p66
      %s69 = sadd.s32 %s68, 1
      %p72 = scmp.eq.s32.totalorder %s20, 7
      %p73 = scmp.ne.s32.totalorder %s68, %s70
      %p74 = scmp.eq.s32.totalorder %s20, 0
      %p75 = por %p73, %p74
      %p76 = scmp.ne.s32.totalorder %s68, %s70
      %p77 = scmp.eq.s32.totalorder %s25, 7
      %p78 = por %p76, %p77
      %p79 = scmp.ne.s32.totalorder %s70, %s71
      %p80 = scmp.eq.s32.totalorder %s25, 0
      %p81 = por %p79, %p80
      %p82 = scmp.ne.s32.totalorder %s70, %s71
      %p83 = scmp.eq.s32.totalorder %s26, 7
      %p84 = por %p82, %p83
      %p86 = scmp.ne.s32.totalorder %s71, %s85
      %p87 = scmp.eq.s32.totalorder %s26, 0
      %p88 = por %p86, %p87
      %s90 = sadd.s32 %s89, 1
      %p93 = scmp.eq.s32.totalorder %s20, 7
      %p94 = scmp.ne.s32.totalorder %s89, %s91
      %p95 = scmp.eq.s32.totalorder %s20, 0
      %p96 = por %p94, %p95
      %p97 = scmp.ne.s32.totalorder %s89, %s91
      %p98 = scmp.eq.s32.totalorder %s25, 7
      %p99 = por %p97, %p98
      %p100 = scmp.ne.s32.totalorder %s91, %s92
      %p101 = scmp.eq.s32.totalorder %s25, 0
      %p102 = por %p100, %p101
      %p103 = scmp.ne.s32.totalorder %s91, %s92
      %p104 = scmp.eq.s32.totalorder %s26, 7
      %p105 = por %p103, %p104
      %p107 = scmp.ne.s32.totalorder %s92, %s106
      %p108 = scmp.eq.s32.totalorder %s26, 0
      %p109 = por %p107, %p108
      %s110 = ssub.s32 %s27, %s46
      %s111 = ssub.s32 %s28, %s42
      %s112 = sor.u32 %s110, %s111
      %p113 = scmp.eq.s32.totalorder %s112, 0
      %s115 = sadd.s32 %s114, 1
      %s116 = scalar_select %p113, %s114, %s115
      %p119 = pneg %p113
      %p120 = scmp.eq.s32.totalorder %s20, 7
      %p121 = por %p119, %p120
      %p122 = scmp.ne.s32.totalorder %s114, %s117
      %p123 = scmp.eq.s32.totalorder %s20, 0
      %p124 = por %p122, %p123
      %p125 = scmp.ne.s32.totalorder %s114, %s117
      %p126 = scmp.eq.s32.totalorder %s25, 7
      %p127 = por %p125, %p126
      %p128 = scmp.ne.s32.totalorder %s117, %s118
      %p129 = scmp.eq.s32.totalorder %s25, 0
      %p130 = por %p128, %p129
      %p131 = scmp.ne.s32.totalorder %s117, %s118
      %p132 = scmp.eq.s32.totalorder %s26, 7
      %p133 = por %p131, %p132
      %p135 = scmp.ne.s32.totalorder %s118, %s134
      %p136 = scmp.eq.s32.totalorder %s26, 0
      %p137 = por %p135, %p136
      %s138 = ssub.s32 %s27, %s46
      %s139 = ssub.s32 %s28, %s42
      %s140 = sor.u32 %s138, %s139
      %p141 = scmp.eq.s32.totalorder %s140, 0
      %s143 = sadd.s32 %s142, 1
      %s144 = scalar_select %p141, %s142, %s143
      %p147 = pneg %p141
      %p148 = scmp.eq.s32.totalorder %s20, 7
      %p149 = por %p147, %p148
      %p150 = scmp.ne.s32.totalorder %s142, %s145
      %p151 = scmp.eq.s32.totalorder %s20, 0
      %p152 = por %p150, %p151
      %p153 = scmp.ne.s32.totalorder %s142, %s145
      %p154 = scmp.eq.s32.totalorder %s25, 7
      %p155 = por %p153, %p154
      %p156 = scmp.ne.s32.totalorder %s145, %s146
      %p157 = scmp.eq.s32.totalorder %s25, 0
      %p158 = por %p156, %p157
      %p159 = scmp.ne.s32.totalorder %s145, %s146
      %p160 = scmp.eq.s32.totalorder %s26, 7
      %p161 = por %p159, %p160
      %p163 = scmp.ne.s32.totalorder %s146, %s162
      %p164 = scmp.eq.s32.totalorder %s26, 0
      %p165 = por %p163, %p164
      %s166 = ssub.s32 %s27, %s46
      %p167 = scmp.eq.s32.totalorder %s166, 0
      %s169 = sadd.s32 %s168, 1
      %s170 = scalar_select %p167, %s168, %s169
      %p173 = pneg %p167
      %p174 = scmp.eq.s32.totalorder %s20, 7
      %p175 = por %p173, %p174
      %p176 = scmp.ne.s32.totalorder %s168, %s171
      %p177 = scmp.eq.s32.totalorder %s20, 0
      %p178 = por %p176, %p177
      %p179 = scmp.ne.s32.totalorder %s168, %s171
      %p180 = scmp.eq.s32.totalorder %s25, 7
      %p181 = por %p179, %p180
      %p182 = scmp.ne.s32.totalorder %s171, %s172
      %p183 = scmp.eq.s32.totalorder %s25, 0
      %p184 = por %p182, %p183
      %p185 = scmp.ne.s32.totalorder %s171, %s172
      %p186 = scmp.eq.s32.totalorder %s26, 7
      %p187 = por %p185, %p186
      %p189 = scmp.ne.s32.totalorder %s172, %s188
      %p190 = scmp.eq.s32.totalorder %s26, 0
      %p191 = por %p189, %p190
      %s192 = ssub.s32 %s27, %s46
      %p193 = scmp.eq.s32.totalorder %s192, 0
      %s195 = sadd.s32 %s194, 1
      %s196 = scalar_select %p193, %s194, %s195
      %p199 = pneg %p193
      %p200 = scmp.eq.s32.totalorder %s20, 7
      %p201 = por %p199, %p200
      %p202 = scmp.ne.s32.totalorder %s194, %s197
      %p203 = scmp.eq.s32.totalorder %s20, 0
      %p204 = por %p202, %p203
      %p205 = scmp.ne.s32.totalorder %s194, %s197
      %p206 = scmp.eq.s32.totalorder %s25, 7
      %p207 = por %p205, %p206
      %p208 = scmp.ne.s32.totalorder %s197, %s198
      %p209 = scmp.eq.s32.totalorder %s25, 0
      %p210 = por %p208, %p209
      %p211 = scmp.ne.s32.totalorder %s197, %s198
      %p212 = scmp.eq.s32.totalorder %s26, 7
      %p213 = por %p211, %p212
      %p215 = scmp.ne.s32.totalorder %s198, %s214
      %p216 = scmp.eq.s32.totalorder %s26, 0
      %p217 = por %p215, %p216
      %p218 = scmp.le.s32.totalorder 1, %s20
      %p219 = scmp.lt.s32.totalorder %s20, 9
      %p220 = pnand %p218, %p219
      %p221 = pneg %p220
      // Predicated region
      $region9: #{tpu_custom_call.1} parent=5 // pred_check
        _
      $region10: #{tpu_custom_call.1} parent=5 // pred_check_branch
        %223 = sbr.rel (%p220) target = $region12
      $region11: #{tpu_custom_call.1} parent=5 // pred_region
        %s224 = ssub.s32 %s20, 1
        // Predicated region
        $region13: #{tpu_custom_call.1} parent=11 // pred_check
          %p225 = pneg %p60
        $region14: #{tpu_custom_call.1} parent=11 // pred_check_branch
          %227 = sbr.rel (%p225) target = $region16
        $region15: #{tpu_custom_call.1} parent=11 // pred_region
          %s229 = ssub.s32 32, 32
          %230 = vsyncadd [#allocation9], %s229
          %s232 = sshll.u32 %s0, 4
          %s233 = int_to_ptr.vmem [resolvable:$true] %s232
          %235 = dma.vmem_to_smem %s233, 32, [#allocation6], [#allocation9]
        $region16: #{tpu_custom_call.1} parent=11 // pred_fallthru
          _
        // Predicated region
        $region17: #{tpu_custom_call.1} parent=11 // pred_check
          %p236 = pneg %p81
        $region18: #{tpu_custom_call.1} parent=11 // pred_check_branch
          %238 = sbr.rel (%p236) target = $region20
        $region19: #{tpu_custom_call.1} parent=11 // pred_region
          %s240 = ssub.s32 32, 32
          %241 = vsyncadd [#allocation11], %s240
          %s243 = sshll.u32 %s1, 4
          %s244 = int_to_ptr.vmem [resolvable:$true] %s243
          %246 = dma.vmem_to_smem %s244, 32, [#allocation10], [#allocation11]
        $region20: #{tpu_custom_call.1} parent=11 // pred_fallthru
          _
        // Predicated region
        $region21: #{tpu_custom_call.1} parent=11 // pred_check
          %p247 = pneg %p102
        $region22: #{tpu_custom_call.1} parent=11 // pred_check_branch
          %249 = sbr.rel (%p247) target = $region24
        $region23: #{tpu_custom_call.1} parent=11 // pred_region
          %s251 = ssub.s32 32, 32
          %252 = vsyncadd [#allocation11], %s251
          %s254 = sshll.u32 %s2, 4
          %s255 = int_to_ptr.vmem [resolvable:$true] %s254
          %257 = dma.vmem_to_smem %s255, 32, [#allocation12], [#allocation11]
        $region24: #{tpu_custom_call.1} parent=11 // pred_fallthru
          _
      $region12: #{tpu_custom_call.1} parent=5 // pred_fallthru
        _
      %p258 = scmp.lt.s32.totalorder %s20, 8
      // Predicated region
      $region25: #{tpu_custom_call.1} parent=5 // pred_check
        %p259 = pneg %p258
      $region26: #{tpu_custom_call.1} parent=5 // pred_check_branch
        %261 = sbr.rel (%p259) target = $region28
      $region27: #{tpu_custom_call.1} parent=5 // pred_region
        // Predicated region
        $region29: #{tpu_custom_call.1} parent=27 // pred_check
          %p262 = pneg %p124
        $region30: #{tpu_custom_call.1} parent=27 // pred_check_branch
          %264 = sbr.rel (%p262) target = $region32
        $region31: #{tpu_custom_call.1} parent=27 // pred_region
          %s265 = sand.u32 %s114, 1
          %s266 = scalar_lea.sflag [#allocation7], %s265
          %s267 = sand.u32 %s114, 1
          %s268 = smul.addr %s267, 4
          %s269 = scalar_lea.vmem [#allocation13], %s268
          %s271 = ssub.s32 64, 64
          %272 = vsyncadd %s266, %s271
          %s273 = smul.addr %s27, 2
          %s274 = sadd.s32 %s28, %s273
          %s275 = smul.addr %s274, 64
          %s276 = scalar_lea.hbm %s3, %s275
          %s278 = sshll.u32 %s269, 4
          %s279 = int_to_ptr.vmem [resolvable:$true] %s278
          %281 = dma.hbm_to_vmem [thread:$0]  %s276, 64, %s279, %s266
        $region32: #{tpu_custom_call.1} parent=27 // pred_fallthru
          _
        // Predicated region
        $region33: #{tpu_custom_call.1} parent=27 // pred_check
          %p282 = pneg %p152
        $region34: #{tpu_custom_call.1} parent=27 // pred_check_branch
          %284 = sbr.rel (%p282) target = $region36
        $region35: #{tpu_custom_call.1} parent=27 // pred_region
          %p285 = scmp.lt.s32.totalorder %s27, 1
          %s286 = scalar_select %p285, %s27, 1
          %p287 = scmp.lt.s32.totalorder %s28, 1
          %s288 = scalar_select %p287, %s28, 1
          %s289 = smul.addr %s286, 2
          %s290 = sadd.s32 %s288, %s289
          %s291 = smul.addr %s290, 4
          %s292 = scalar_lea.vmem %s4, %s291
        $region36: #{tpu_custom_call.1} parent=27 // pred_fallthru
          _
        // Predicated region
        $region37: #{tpu_custom_call.1} parent=27 // pred_check
          %p293 = pneg %p178
        $region38: #{tpu_custom_call.1} parent=27 // pred_check_branch
          %295 = sbr.rel (%p293) target = $region40
        $region39: #{tpu_custom_call.1} parent=27 // pred_region
          %p296 = scmp.lt.s32.totalorder %s27, 1
          %s297 = scalar_select %p296, %s27, 1
          %s298 = smul.addr %s297, 2
          %s299 = smul.addr %s298, 8
          %s300 = scalar_lea.vmem %s5, %s299
        $region40: #{tpu_custom_call.1} parent=27 // pred_fallthru
          _
      $region28: #{tpu_custom_call.1} parent=5 // pred_fallthru
        _
      %p301 = scmp.le.s32.totalorder 1, %s20
      %p302 = scmp.lt.s32.totalorder %s20, 9
      %p303 = pnand %p301, %p302
      %p304 = pneg %p303
      // Predicated region
      $region41: #{tpu_custom_call.1} parent=5 // pred_check
        _
      $region42: #{tpu_custom_call.1} parent=5 // pred_check_branch
        %306 = sbr.rel (%p303) target = $region44
      $region43: #{tpu_custom_call.1} parent=5 // pred_region
        %s307 = ssub.s32 %s20, 1
        // Predicated region
        $region45: #{tpu_custom_call.1} parent=43 // pred_check
          %p308 = pneg %p60
        $region46: #{tpu_custom_call.1} parent=43 // pred_check_branch
          %310 = sbr.rel (%p308) target = $region48
        $region47: #{tpu_custom_call.1} parent=43 // pred_region
          %311 = dma.done [#allocation9], 32
        $region48: #{tpu_custom_call.1} parent=43 // pred_fallthru
          _
        // Predicated region
        $region49: #{tpu_custom_call.1} parent=43 // pred_check
          %p312 = pneg %p81
        $region50: #{tpu_custom_call.1} parent=43 // pred_check_branch
          %314 = sbr.rel (%p312) target = $region52
        $region51: #{tpu_custom_call.1} parent=43 // pred_region
          %315 = dma.done [#allocation11], 32
        $region52: #{tpu_custom_call.1} parent=43 // pred_fallthru
          _
        // Predicated region
        $region53: #{tpu_custom_call.1} parent=43 // pred_check
          %p316 = pneg %p102
        $region54: #{tpu_custom_call.1} parent=43 // pred_check_branch
          %318 = sbr.rel (%p316) target = $region56
        $region55: #{tpu_custom_call.1} parent=43 // pred_region
          %319 = dma.done [#allocation11], 32
        $region56: #{tpu_custom_call.1} parent=43 // pred_fallthru
          _
        %s320 = sand.u32 %s117, 1
        %s321 = scalar_lea.sflag [#allocation7], %s320
        %s322 = sand.u32 %s117, 1
        %s323 = smul.addr %s322, 4
        %s324 = scalar_lea.vmem [#allocation13], %s323
        // Predicated region
        $region57: #{tpu_custom_call.1} parent=43 // pred_check
          %p325 = pneg %p130
        $region58: #{tpu_custom_call.1} parent=43 // pred_check_branch
          %327 = sbr.rel (%p325) target = $region60
        $region59: #{tpu_custom_call.1} parent=43 // pred_region
          %328 = dma.done %s321, 64
        $region60: #{tpu_custom_call.1} parent=43 // pred_fallthru
          _
        %329 = sfence
        %p330 = pneg %p60
        %p331 = pneg %p57
        %p332 = pneg %p81
        %p333 = pneg %p78
        %p334 = pneg %p102
        %p335 = pneg %p99
        %s336 = sand.u32 %s117, 1
        %s337 = scalar_lea.sflag [#allocation7], %s336
        %s338 = sand.u32 %s117, 1
        %s339 = smul.addr %s338, 4
        %s340 = scalar_lea.vmem [#allocation13], %s339
        %p341 = pneg %p130
        %p342 = pneg %p127
        %p343 = scmp.lt.s32.totalorder %s30, 1
        %s344 = scalar_select %p343, %s30, 1
        %p345 = scmp.lt.s32.totalorder %s31, 1
        %s346 = scalar_select %p345, %s31, 1
        %s347 = smul.addr %s344, 2
        %s348 = sadd.s32 %s346, %s347
        %s349 = smul.addr %s348, 4
        %s350 = scalar_lea.vmem %s4, %s349
        %p351 = pneg %p158
        %p352 = pneg %p155
        %p353 = scmp.lt.s32.totalorder %s30, 1
        %s354 = scalar_select %p353, %s30, 1
        %s355 = smul.addr %s354, 2
        %s356 = smul.addr %s355, 8
        %s357 = scalar_lea.vmem %s5, %s356
        %p358 = pneg %p184
        %p359 = pneg %p181
        %p360 = pneg %p210
        %p361 = pneg %p207
        %s362 = sand.u32 %s197, 1
        %s363 = scalar_lea.sflag [#allocation8], %s362
        %s364 = sand.u32 %s197, 1
        %s365 = scalar_lea.vmem [#allocation14], %s364
        %p366 = scmp.lt.s32.totalorder %s30, 1
        %s367 = scalar_select %p366, %s30, 1
        %p368 = scmp.lt.s32.totalorder %s31, 1
        %s369 = scalar_select %p368, %s31, 1
        %s370 = smul.addr %s367, 2
        %s371 = sadd.s32 %s369, %s370
        %s372 = smul.addr %s371, 4
        %s373 = scalar_lea.vmem %s4, %s372
        %p374 = scmp.lt.s32.totalorder %s30, 1
        %s375 = scalar_select %p374, %s30, 1
        %s376 = smul.addr %s375, 2
        %s377 = smul.addr %s376, 8
        %s378 = scalar_lea.vmem %s5, %s377
        %v379 = vlaneseq
        %v380 = vand.u32 %v379, 127
        %p381 = scmp.eq.s32.totalorder %s31, 0
        %p382 = scmp.eq.s32.totalorder %s32, 0
        %p383 = pnand %p381, %p382
        %p384 = pneg %p383
        // Predicated region
        $region61: #{tpu_custom_call.1} parent=43 // pred_check
          _
        $region62: #{tpu_custom_call.1} parent=43 // pred_check_branch
          %386 = sbr.rel (%p383) target = $region64
        $region63: #{tpu_custom_call.1} parent=43 // pred_region
          %387 = vst [vmem:[#allocation5] sm:$0x1] 0.0
          %388 = vst [vmem:[#allocation2 + $0x4] sm:$0x1] 1.0
          %389 = vst [vmem:[#allocation2 + $0x5] sm:$0x7] 0.0
        $region64: #{tpu_custom_call.1} parent=43 // pred_fallthru
          _
        // Predicated region
        $region65: #{tpu_custom_call.1} parent=43 // pred_check
          %p390 = pneg %p382
        $region66: #{tpu_custom_call.1} parent=43 // pred_check_branch
          %392 = sbr.rel (%p390) target = $region68
        $region67: #{tpu_custom_call.1} parent=43 // pred_region
          %v393 = vld [vmem:[%s324] sm:$0xf]
          %s394 = smul.u32 %s30, 128
          %s395 = sld [smem:[#allocation6 + %s394]]
          %v396 = vstv %s395
          %v397 = vmul.f32 %v396, %v393
          %s398 = sadd.s32 %s394, 1
          %s399 = sld [smem:[#allocation6 + %s398]]
          %v400 = vstv %s399
          %v401 = vmul.f32 %v400, %v393
          %v403 = vrot.slane %v401, 1
          %v405 = vadd.f32 %v397, %v403
          %s406 = sadd.s32 %s394, 2
          %s407 = sld [smem:[#allocation6 + %s406]]
          %v408 = vstv %s407
          %v409 = vmul.f32 %v408, %v393
          %v411 = vrot.slane %v409, 2
          %v413 = vadd.f32 %v405, %v411
          %s414 = sld [smem:[#allocation10 + %s394]]
          %v415 = vstv %s414
          %v416 = vadd.f32 %v413, %v415
          %s417 = sadd.s32 %s394, 3
          %s418 = sld [smem:[#allocation6 + %s417]]
          %v419 = vstv %s418
          %v420 = vmul.f32 %v419, %v393
          %s421 = sadd.s32 %s394, 4
          %s422 = sld [smem:[#allocation6 + %s421]]
          %v423 = vstv %s422
          %v424 = vmul.f32 %v423, %v393
          %v426 = vrot.slane %v424, 1
          %v428 = vadd.f32 %v420, %v426
          %s429 = sadd.s32 %s394, 5
          %s430 = sld [smem:[#allocation6 + %s429]]
          %v431 = vstv %s430
          %v432 = vmul.f32 %v431, %v393
          %v434 = vrot.slane %v432, 2
          %v436 = vadd.f32 %v428, %v434
          %s437 = sld [smem:[#allocation10 + %s398]]
          %v438 = vstv %s437
          %v439 = vadd.f32 %v436, %v438
          %s440 = sadd.s32 %s394, 6
          %s441 = sld [smem:[#allocation6 + %s440]]
          %v442 = vstv %s441
          %v443 = vmul.f32 %v442, %v393
          %s444 = sadd.s32 %s394, 7
          %s445 = sld [smem:[#allocation6 + %s444]]
          %v446 = vstv %s445
          %v447 = vmul.f32 %v446, %v393
          %v449 = vrot.slane %v447, 1
          %v451 = vadd.f32 %v443, %v449
          %s452 = sadd.s32 %s394, 8
          %s453 = sld [smem:[#allocation6 + %s452]]
          %v454 = vstv %s453
          %v455 = vmul.f32 %v454, %v393
          %v457 = vrot.slane %v455, 2
          %v459 = vadd.f32 %v451, %v457
          %s460 = sld [smem:[#allocation10 + %s406]]
          %v461 = vstv %s460
          %v462 = vadd.f32 %v459, %v461
          %v463 = vld [vmem:[%s373] sm:$0x7]
          %s464 = sld [smem:[#allocation12 + %s394]]
          %v465 = vstv %s464
          %v466 = vsub.f32 %v416, %v465
          %s467 = sld [smem:[#allocation12 + %s398]]
          %v468 = vstv %s467
          %v469 = vsub.f32 %v439, %v468
          %s470 = sld [smem:[#allocation12 + %s406]]
          %v471 = vstv %s470
          %v472 = vsub.f32 %v462, %v471
          %v473 = vsub.f32 %v463, %v466
          %v475 = vrot.slane %v469, 7
          %v477 = vsub.f32 %v463, %v475
          %v479 = vrot.slane %v472, 6
          %v481 = vsub.f32 %v463, %v479
          %v482 = vmul.f32 %v473, %v473
          %v483 = vmul.f32 %v477, %v477
          %v485 = vrot.slane %v483, 1
          %v487 = vadd.f32 %v482, %v485
          %v488 = vmul.f32 %v481, %v481
          %v490 = vrot.slane %v488, 2
          %v492 = vadd.f32 %v487, %v490
          %v493 = vrsqrt.pop %v492
          %v494 = vmul.f32 %v492, %v493
          %vm495 = vcmp.eq.f32.partialorder %v492, inf
          %v496 = vsel %vm495, %v492, %v494
          %vm497 = vcmp.eq.f32.partialorder %v492, 0.0
          %v498 = vand.u32 %v492, 2147483648
          %v499 = vsel %vm497, %v498, %v496
          %v501 = vrot.slane %v393, 3
          %v503 = vmul.f32 %v499, %v501
          %v504 = vand.u32 2147483647, %v473
          %v505 = vand.u32 2147483647, %v477
          %v507 = vrot.slane %v505, 1
          %v509 = vadd.f32 %v504, %v507
          %v510 = vand.u32 2147483647, %v481
          %v512 = vrot.slane %v510, 2
          %v514 = vadd.f32 %v509, %v512
          %v515 = vmul.f32 %v514, %v501
          %v516 = vmul.f32 %v416, %v416
          %v517 = vmul.f32 %v439, %v439
          %v518 = vadd.f32 %v516, %v517
          %v519 = vmul.f32 %v462, %v462
          %v520 = vadd.f32 %v518, %v519
          %v521 = vrsqrt.pop %v520
          %v522 = vmul.f32 %v520, %v521
          %vm523 = vcmp.eq.f32.partialorder %v520, inf
          %v524 = vsel %vm523, %v520, %v522
          %vm525 = vcmp.eq.f32.partialorder %v520, 0.0
          %v526 = vand.u32 %v520, 2147483648
          %v527 = vsel %vm525, %v526, %v524
          %vm528 = vcmp.lt.f32.partialorder %v527, 1.0
          %v529 = vsel %vm528, 1e-05, %v527
          %v530 = vrcp.pop %v529
          %v531 = vmul.f32 80.0, %v530
          %v532 = vsel %vm528, 0.0, %v531
          %vm533 = vcmp.eq.s32.totalorder %v380, 0
          %v534 = vmul.f32 %v503, %v532
          %vm535 = vcmask 1040384
          %v536 = vsel %vm535, %v534, 0.0
          %537 = vadd.xlane.f32.xlu0 %v536
          %v538 = vpop.xlane.xlu0 %537
          %v539 = vrot.slane %v538, 4
          %v540 = vadd.f32 %v538, %v539
          %v541 = vrot.slane %v540, 2
          %v542 = vadd.f32 %v540, %v541
          %v543 = vrot.slane %v542, 1
          %v544 = vadd.f32 %v542, %v543
          %s545 = vtos %v544
          %v546 = vstv %s545
          %v547 = vsel %vm533, %v546, 0.0
          %vm548 = vcmp.eq.s32.totalorder %v380, 1
          %v549 = vsel %vm535, %v503, 0.0
          %550 = vadd.xlane.f32.xlu0 %v549
          %v551 = vpop.xlane.xlu0 %550
          %v552 = vrot.slane %v551, 4
          %v553 = vadd.f32 %v551, %v552
          %v554 = vrot.slane %v553, 2
          %v555 = vadd.f32 %v553, %v554
          %v556 = vrot.slane %v555, 1
          %v557 = vadd.f32 %v555, %v556
          %s558 = vtos %v557
          %v559 = vstv %s558
          %v560 = vsel %vm548, %v559, 0.0
          %v561 = vadd.f32 %v547, %v560
          %vm562 = vcmp.eq.s32.totalorder %v380, 2
          %v563 = vsel %vm535, %v515, 0.0
          %564 = vadd.xlane.f32.xlu0 %v563
          %v565 = vpop.xlane.xlu0 %564
          %v566 = vrot.slane %v565, 4
          %v567 = vadd.f32 %v565, %v566
          %v568 = vrot.slane %v567, 2
          %v569 = vadd.f32 %v567, %v568
          %v570 = vrot.slane %v569, 1
          %v571 = vadd.f32 %v569, %v570
          %s572 = vtos %v571
          %v573 = vstv %s572
          %v574 = vsel %vm562, %v573, 0.0
          %v575 = vadd.f32 %v561, %v574
          %v576 = vld [vmem:[#allocation5] sm:$0x1]
          %v577 = vadd.f32 %v576, %v575
          %578 = vst [vmem:[#allocation5] sm:$0x1] %v577
          %v579 = vmul.f32 %v466, -2.0
          %580 = vst [vmem:[#allocation2] sm:$0x1] %v579
          %v581 = vmul.f32 %v469, -2.0
          %582 = vst [vmem:[#allocation2 + $0x1] sm:$0x1] %v581
          %v583 = vmul.f32 %v472, -2.0
          %584 = vst [vmem:[#allocation2 + $0x2] sm:$0x1] %v583
          %v585 = vmul.f32 %v466, %v466
          %v586 = vmul.f32 %v469, %v469
          %v587 = vadd.f32 %v585, %v586
          %v588 = vmul.f32 %v472, %v472
          %v589 = vadd.f32 %v587, %v588
          %v590 = vsub.f32 1.0, %v393
          %v591 = vmul.f32 %v590, 1e+30
          %v593 = vrot.slane %v591, 3
          %v595 = vadd.f32 %v589, %v593
          %596 = vst [vmem:[#allocation2 + $0x3] sm:$0x1] %v595
        $region68: #{tpu_custom_call.1} parent=43 // pred_fallthru
          _
        %s597 = smul.u32 %s32, 8
        %s598 = scalar_lea.vmem %s378, %s597
        %v599 = vld [vmem:[%s598] sm:$0xff]
        %v600 = vld [vmem:[#allocation2] sm:$0xff]
        %601 = vxpose.xlu0.b32.start [1/16] %v600, 128
        %602 = vxpose.xlu0.b32.cont [2/16] 0.0, 128
        %603 = vxpose.xlu0.b32.cont [3/16] 0.0, 128
        %604 = vxpose.xlu0.b32.cont [4/16] 0.0, 128
        %605 = vxpose.xlu0.b32.cont [5/16] 0.0, 128
        %606 = vxpose.xlu0.b32.cont [6/16] 0.0, 128
        %607 = vxpose.xlu0.b32.cont [7/16] 0.0, 128
        %608 = vxpose.xlu0.b32.cont [8/16] 0.0, 128
        %609 = vxpose.xlu0.b32.cont [9/16] 0.0, 128
        %610 = vxpose.xlu0.b32.cont [10/16] 0.0, 128
        %611 = vxpose.xlu0.b32.cont [11/16] 0.0, 128
        %612 = vxpose.xlu0.b32.cont [12/16] 0.0, 128
        %613 = vxpose.xlu0.b32.cont [13/16] 0.0, 128
        %614 = vxpose.xlu0.b32.cont [14/16] 0.0, 128
        %615 = vxpose.xlu0.b32.cont [15/16] 0.0, 128
        %616 = vxpose.xlu0.b32.end [16/16] 0.0, 128
        %v617 = vpop.trf.xlu0
        %v618 = vpop.trf.xlu0
        %v619 = vpop.trf.xlu0
        %v620 = vpop.trf.xlu0
        %v621 = vpop.trf.xlu0
        %v622 = vpop.trf.xlu0
        %v623 = vpop.trf.xlu0
        %v624 = vpop.trf.xlu0
        %v625 = vpop.trf.xlu0
        %v626 = vpop.trf.xlu0
        %v627 = vpop.trf.xlu0
        %v628 = vpop.trf.xlu0
        %v629 = vpop.trf.xlu0
        %v630 = vpop.trf.xlu0
        %v631 = vpop.trf.xlu0
        %v632 = vpop.trf.xlu0
        %vm633 = vcmask 64512
        %v635 = vsel %vm633, %v617, 0
        %v638 = vsel %vm633, %v618, 0
        %v641 = vsel %vm633, %v619, 0
        %v644 = vsel %vm633, %v620, 0
        %v647 = vsel %vm633, %v621, 0
        %v650 = vsel %vm633, %v622, 0
        %v653 = vsel %vm633, %v623, 0
        %v656 = vsel %vm633, %v624, 0
        %v659 = vsel %vm633, %v625, 0
        %v662 = vsel %vm633, %v626, 0
        %v665 = vsel %vm633, %v627, 0
        %v668 = vsel %vm633, %v628, 0
        %v671 = vsel %vm633, %v629, 0
        %v674 = vsel %vm633, %v630, 0
        %v677 = vsel %vm633, %v631, 0
        %v680 = vsel %vm633, %v632, 0
        %682 = vmatprep.subr.mxu0 0.0
        %683 = vmatpush1.msra.mxu0 %v599
        %684 = vmatprep.subr.mxu0 0.0
        %685 = vmatpush1.msra.mxu0 0.0
        %686 = vmatprep.subr.mxu0 0.0
        %687 = vmatpush1.msra.mxu0 0.0
        %688 = vmatprep.subr.mxu0 0.0
        %689 = vmatpush1.msra.mxu0 0.0
        %690 = vmatprep.subr.mxu0 0.0
        %691 = vmatpush1.msra.mxu0 0.0
        %692 = vmatprep.subr.mxu0 0.0
        %693 = vmatpush1.msra.mxu0 0.0
        %694 = vmatprep.subr.mxu0 0.0
        %695 = vmatpush1.msra.mxu0 0.0
        %696 = vmatprep.subr.mxu0 0.0
        %697 = vmatpush1.msra.mxu0 0.0
        %698 = vmatprep.subr.mxu0 0.0
        %699 = vmatpush1.msra.mxu0 0.0
        %700 = vmatprep.subr.mxu0 0.0
        %701 = vmatpush1.msra.mxu0 0.0
        %702 = vmatprep.subr.mxu0 0.0
        %703 = vmatpush1.msra.mxu0 0.0
        %704 = vmatprep.subr.mxu0 0.0
        %705 = vmatpush1.msra.mxu0 0.0
        %706 = vmatprep.subr.mxu0 0.0
        %707 = vmatpush1.msra.mxu0 0.0
        %708 = vmatprep.subr.mxu0 0.0
        %709 = vmatpush1.msra.mxu0 0.0
        %710 = vmatprep.subr.mxu0 0.0
        %711 = vmatpush1.msra.mxu0 0.0
        %712 = vmatprep.subr.mxu0 0.0
        %713 = vmatpush1.msra.mxu0 0.0
        %714 = vmatprep.subr.mxu0 0.0
        %715 = vmatpush1.msra.mxu0 0.0
        %716 = vmatprep.subr.mxu0 0.0
        %717 = vmatpush1.msra.mxu0 0.0
        %718 = vmatprep.subr.mxu0 0.0
        %719 = vmatpush1.msra.mxu0 0.0
        %720 = vmatprep.subr.mxu0 0.0
        %721 = vmatpush1.msra.mxu0 0.0
        %722 = vmatprep.subr.mxu0 0.0
        %723 = vmatpush1.msra.mxu0 0.0
        %724 = vmatprep.subr.mxu0 0.0
        %725 = vmatpush1.msra.mxu0 0.0
        %726 = vmatprep.subr.mxu0 0.0
        %727 = vmatpush1.msra.mxu0 0.0
        %728 = vmatprep.subr.mxu0 0.0
        %729 = vmatpush1.msra.mxu0 0.0
        %730 = vmatprep.subr.mxu0 0.0
        %731 = vmatpush1.msra.mxu0 0.0
        %732 = vmatprep.subr.mxu0 0.0
        %733 = vmatpush1.msra.mxu0 0.0
        %734 = vmatprep.subr.mxu0 0.0
        %735 = vmatpush1.msra.mxu0 0.0
        %736 = vmatprep.subr.mxu0 0.0
        %737 = vmatpush1.msra.mxu0 0.0
        %738 = vmatprep.subr.mxu0 0.0
        %739 = vmatpush1.msra.mxu0 0.0
        %740 = vmatprep.subr.mxu0 0.0
        %741 = vmatpush1.msra.mxu0 0.0
        %742 = vmatprep.subr.mxu0 0.0
        %743 = vmatpush1.msra.mxu0 0.0
        %744 = vmatprep.subr.mxu0 0.0
        %745 = vmatpush1.msra.mxu0 0.0
        %746 = vmatprep.mubr.f32.mxu0 0.0
        %747 = vmatmul.mubr.f32.gmra.mrb[0].mxu0 %v635
        %v748 = vpop.f32.mrb[0].mxu0
        %v749 = vadd.f32 0.0, %v748
        %v750 = vpop.f32.mrb[0].mxu0
        %751 = vmatprep.mubr.f32.mxu0 0.0
        %752 = vmatmul.mubr.f32.gmra.mrb[0].mxu0 %v638
        %v753 = vpop.f32.mrb[0].mxu0
        %v754 = vadd.f32 0.0, %v753
        %v755 = vpop.f32.mrb[0].mxu0
        %756 = vmatprep.mubr.f32.mxu0 0.0
        %757 = vmatmul.mubr.f32.gmra.mrb[0].mxu0 %v641
        %v758 = vpop.f32.mrb[0].mxu0
        %v759 = vadd.f32 0.0, %v758
        %v760 = vpop.f32.mrb[0].mxu0
        %761 = vmatprep.mubr.f32.mxu0 0.0
        %762 = vmatmul.mubr.f32.gmra.mrb[0].mxu0 %v644
        %v763 = vpop.f32.mrb[0].mxu0
        %v764 = vadd.f32 0.0, %v763
        %v765 = vpop.f32.mrb[0].mxu0
        %766 = vmatprep.mubr.f32.mxu0 0.0
        %767 = vmatmul.mubr.f32.gmra.mrb[0].mxu0 %v647
        %v768 = vpop.f32.mrb[0].mxu0
        %v769 = vadd.f32 0.0, %v768
        %v770 = vpop.f32.mrb[0].mxu0
        %771 = vmatprep.mubr.f32.mxu0 0.0
        %772 = vmatmul.mubr.f32.gmra.mrb[0].mxu0 %v650
        %v773 = vpop.f32.mrb[0].mxu0
        %v774 = vadd.f32 0.0, %v773
        %v775 = vpop.f32.mrb[0].mxu0
        %776 = vmatprep.mubr.f32.mxu0 0.0
        %777 = vmatmul.mubr.f32.gmra.mrb[0].mxu0 %v653
        %v778 = vpop.f32.mrb[0].mxu0
        %v779 = vadd.f32 0.0, %v778
        %v780 = vpop.f32.mrb[0].mxu0
        %781 = vmatprep.mubr.f32.mxu0 0.0
        %782 = vmatmul.mubr.f32.gmra.mrb[0].mxu0 %v656
        %v783 = vpop.f32.mrb[0].mxu0
        %v784 = vadd.f32 0.0, %v783
        %v785 = vpop.f32.mrb[0].mxu0
        %786 = vmatprep.mubr.f32.mxu0 0.0
        %787 = vmatmul.mubr.f32.gmra.mrb[0].mxu0 %v659
        %v788 = vpop.f32.mrb[0].mxu0
        %v789 = vadd.f32 0.0, %v788
        %v790 = vpop.f32.mrb[0].mxu0
        %791 = vmatprep.mubr.f32.mxu0 0.0
        %792 = vmatmul.mubr.f32.gmra.mrb[0].mxu0 %v662
        %v793 = vpop.f32.mrb[0].mxu0
        %v794 = vadd.f32 0.0, %v793
        %v795 = vpop.f32.mrb[0].mxu0
        %796 = vmatprep.mubr.f32.mxu0 0.0
        %797 = vmatmul.mubr.f32.gmra.mrb[0].mxu0 %v665
        %v798 = vpop.f32.mrb[0].mxu0
        %v799 = vadd.f32 0.0, %v798
        %v800 = vpop.f32.mrb[0].mxu0
        %801 = vmatprep.mubr.f32.mxu0 0.0
        %802 = vmatmul.mubr.f32.gmra.mrb[0].mxu0 %v668
        %v803 = vpop.f32.mrb[0].mxu0
        %v804 = vadd.f32 0.0, %v803
        %v805 = vpop.f32.mrb[0].mxu0
        %806 = vmatprep.mubr.f32.mxu0 0.0
        %807 = vmatmul.mubr.f32.gmra.mrb[0].mxu0 %v671
        %v808 = vpop.f32.mrb[0].mxu0
        %v809 = vadd.f32 0.0, %v808
        %v810 = vpop.f32.mrb[0].mxu0
        %811 = vmatprep.mubr.f32.mxu0 0.0
        %812 = vmatmul.mubr.f32.gmra.mrb[0].mxu0 %v674
        %v813 = vpop.f32.mrb[0].mxu0
        %v814 = vadd.f32 0.0, %v813
        %v815 = vpop.f32.mrb[0].mxu0
        %816 = vmatprep.mubr.f32.mxu0 0.0
        %817 = vmatmul.mubr.f32.gmra.mrb[0].mxu0 %v677
        %v818 = vpop.f32.mrb[0].mxu0
        %v819 = vadd.f32 0.0, %v818
        %v820 = vpop.f32.mrb[0].mxu0
        %821 = vmatprep.mubr.f32.mxu0 0.0
        %822 = vmatmul.mubr.f32.gmra.mrb[0].mxu0 %v680
        %v823 = vpop.f32.mrb[0].mxu0
        %v824 = vadd.f32 0.0, %v823
        %v825 = vpop.f32.mrb[0].mxu0
        %826 = vdwg.mxu0
        %v827 = vmin.f32 %v749, %v754
        %v828 = vmin.f32 %v827, %v759
        %v829 = vmin.f32 %v828, %v764
        %v830 = vmin.f32 %v829, %v769
        %v831 = vmin.f32 %v830, %v774
        %v832 = vmin.f32 %v831, %v779
        %v833 = vmin.f32 %v832, %v784
        %v834 = vmin.f32 %v833, %v789
        %v835 = vmin.f32 %v834, %v794
        %v836 = vmin.f32 %v835, %v799
        %v837 = vmin.f32 %v836, %v804
        %v838 = vmin.f32 %v837, %v809
        %v839 = vmin.f32 %v838, %v814
        %v840 = vmin.f32 %v839, %v819
        %v841 = vmin.f32 %v840, %v824
        // Predicated region
        $region69: #{tpu_custom_call.1} parent=43 // pred_check
          %p842 = pneg %p382
        $region70: #{tpu_custom_call.1} parent=43 // pred_check_branch
          %844 = sbr.rel (%p842) target = $region72
        $region71: #{tpu_custom_call.1} parent=43 // pred_region
          %845 = vst [vmem:[#allocation3] sm:$0xff] %v749
          %846 = vst [vmem:[#allocation3 + $0x8] sm:$0xff] %v754
          %847 = vst [vmem:[#allocation3 + $0x10] sm:$0xff] %v759
          %848 = vst [vmem:[#allocation3 + $0x18] sm:$0xff] %v764
          %849 = vst [vmem:[#allocation3 + $0x20] sm:$0xff] %v769
          %850 = vst [vmem:[#allocation3 + $0x28] sm:$0xff] %v774
          %851 = vst [vmem:[#allocation3 + $0x30] sm:$0xff] %v779
          %852 = vst [vmem:[#allocation3 + $0x38] sm:$0xff] %v784
          %853 = vst [vmem:[#allocation3 + $0x40] sm:$0xff] %v789
          %854 = vst [vmem:[#allocation3 + $0x48] sm:$0xff] %v794
          %855 = vst [vmem:[#allocation3 + $0x50] sm:$0xff] %v799
          %856 = vst [vmem:[#allocation3 + $0x58] sm:$0xff] %v804
          %857 = vst [vmem:[#allocation3 + $0x60] sm:$0xff] %v809
          %858 = vst [vmem:[#allocation3 + $0x68] sm:$0xff] %v814
          %859 = vst [vmem:[#allocation3 + $0x70] sm:$0xff] %v819
          %860 = vst [vmem:[#allocation3 + $0x78] sm:$0xff] %v824
        $region72: #{tpu_custom_call.1} parent=43 // pred_fallthru
          _
        %p861 = scmp.ne.s32.totalorder %s32, 0
        // Predicated region
        $region73: #{tpu_custom_call.1} parent=43 // pred_check
          %p862 = pneg %p861
        $region74: #{tpu_custom_call.1} parent=43 // pred_check_branch
          %864 = sbr.rel (%p862) target = $region76
        $region75: #{tpu_custom_call.1} parent=43 // pred_region
          %v865 = vld [vmem:[#allocation3] sm:$0xff]
          %v866 = vld [vmem:[#allocation3 + $0x8] sm:$0xff]
          %v867 = vld [vmem:[#allocation3 + $0x10] sm:$0xff]
          %v868 = vld [vmem:[#allocation3 + $0x18] sm:$0xff]
          %v869 = vld [vmem:[#allocation3 + $0x20] sm:$0xff]
          %v870 = vld [vmem:[#allocation3 + $0x28] sm:$0xff]
          %v871 = vld [vmem:[#allocation3 + $0x30] sm:$0xff]
          %v872 = vld [vmem:[#allocation3 + $0x38] sm:$0xff]
          %v873 = vld [vmem:[#allocation3 + $0x40] sm:$0xff]
          %v874 = vld [vmem:[#allocation3 + $0x48] sm:$0xff]
          %v875 = vld [vmem:[#allocation3 + $0x50] sm:$0xff]
          %v876 = vld [vmem:[#allocation3 + $0x58] sm:$0xff]
          %v877 = vld [vmem:[#allocation3 + $0x60] sm:$0xff]
          %v878 = vld [vmem:[#allocation3 + $0x68] sm:$0xff]
          %v879 = vld [vmem:[#allocation3 + $0x70] sm:$0xff]
          %v880 = vld [vmem:[#allocation3 + $0x78] sm:$0xff]
          %v881 = vmin.f32 %v865, %v749
          %v882 = vmin.f32 %v866, %v754
          %v883 = vmin.f32 %v867, %v759
          %v884 = vmin.f32 %v868, %v764
          %v885 = vmin.f32 %v869, %v769
          %v886 = vmin.f32 %v870, %v774
          %v887 = vmin.f32 %v871, %v779
          %v888 = vmin.f32 %v872, %v784
          %v889 = vmin.f32 %v873, %v789
          %v890 = vmin.f32 %v874, %v794
          %v891 = vmin.f32 %v875, %v799
          %v892 = vmin.f32 %v876, %v804
          %v893 = vmin.f32 %v877, %v809
          %v894 = vmin.f32 %v878, %v814
          %v895 = vmin.f32 %v879, %v819
          %v896 = vmin.f32 %v880, %v824
          %897 = vst [vmem:[#allocation3] sm:$0xff] %v881
          %898 = vst [vmem:[#allocation3 + $0x8] sm:$0xff] %v882
          %899 = vst [vmem:[#allocation3 + $0x10] sm:$0xff] %v883
          %900 = vst [vmem:[#allocation3 + $0x18] sm:$0xff] %v884
          %901 = vst [vmem:[#allocation3 + $0x20] sm:$0xff] %v885
          %902 = vst [vmem:[#allocation3 + $0x28] sm:$0xff] %v886
          %903 = vst [vmem:[#allocation3 + $0x30] sm:$0xff] %v887
          %904 = vst [vmem:[#allocation3 + $0x38] sm:$0xff] %v888
          %905 = vst [vmem:[#allocation3 + $0x40] sm:$0xff] %v889
          %906 = vst [vmem:[#allocation3 + $0x48] sm:$0xff] %v890
          %907 = vst [vmem:[#allocation3 + $0x50] sm:$0xff] %v891
          %908 = vst [vmem:[#allocation3 + $0x58] sm:$0xff] %v892
          %909 = vst [vmem:[#allocation3 + $0x60] sm:$0xff] %v893
          %910 = vst [vmem:[#allocation3 + $0x68] sm:$0xff] %v894
          %911 = vst [vmem:[#allocation3 + $0x70] sm:$0xff] %v895
          %912 = vst [vmem:[#allocation3 + $0x78] sm:$0xff] %v896
        $region76: #{tpu_custom_call.1} parent=43 // pred_fallthru
          _
        // Predicated region
        $region77: #{tpu_custom_call.1} parent=43 // pred_check
          %p913 = pneg %p381
        $region78: #{tpu_custom_call.1} parent=43 // pred_check_branch
          %915 = sbr.rel (%p913) target = $region80
        $region79: #{tpu_custom_call.1} parent=43 // pred_region
          %s916 = scalar_lea.vmem [#allocation4], %s597
          %917 = vst [vmem:[%s916] sm:$0xff] %v841
        $region80: #{tpu_custom_call.1} parent=43 // pred_fallthru
          _
        %p918 = scmp.ne.s32.totalorder %s31, 0
        // Predicated region
        $region81: #{tpu_custom_call.1} parent=43 // pred_check
          %p919 = pneg %p918
        $region82: #{tpu_custom_call.1} parent=43 // pred_check_branch
          %921 = sbr.rel (%p919) target = $region84
        $region83: #{tpu_custom_call.1} parent=43 // pred_region
          %s922 = scalar_lea.vmem [#allocation4], %s597
          %v923 = vld [vmem:[%s922] sm:$0xff]
          %v924 = vmin.f32 %v923, %v841
          %925 = vst [vmem:[%s922] sm:$0xff] %v924
        $region84: #{tpu_custom_call.1} parent=43 // pred_fallthru
          _
        %p926 = scmp.eq.s32.totalorder %s32, 1
        // Predicated region
        $region85: #{tpu_custom_call.1} parent=43 // pred_check
          %p927 = pneg %p926
        $region86: #{tpu_custom_call.1} parent=43 // pred_check_branch
          %929 = sbr.rel (%p927) target = $region88
        $region87: #{tpu_custom_call.1} parent=43 // pred_region
          %v930 = vld [vmem:[#allocation3] sm:$0xff]
          %v931 = vld [vmem:[#allocation3 + $0x8] sm:$0xff]
          %v932 = vld [vmem:[#allocation3 + $0x10] sm:$0xff]
          %v933 = vld [vmem:[#allocation3 + $0x18] sm:$0xff]
          %v934 = vld [vmem:[#allocation3 + $0x20] sm:$0xff]
          %v935 = vld [vmem:[#allocation3 + $0x28] sm:$0xff]
          %v936 = vld [vmem:[#allocation3 + $0x30] sm:$0xff]
          %v937 = vld [vmem:[#allocation3 + $0x38] sm:$0xff]
          %v938 = vld [vmem:[#allocation3 + $0x40] sm:$0xff]
          %v939 = vld [vmem:[#allocation3 + $0x48] sm:$0xff]
          %v940 = vld [vmem:[#allocation3 + $0x50] sm:$0xff]
          %v941 = vld [vmem:[#allocation3 + $0x58] sm:$0xff]
          %v942 = vld [vmem:[#allocation3 + $0x60] sm:$0xff]
          %v943 = vld [vmem:[#allocation3 + $0x68] sm:$0xff]
          %v944 = vld [vmem:[#allocation3 + $0x70] sm:$0xff]
          %v945 = vld [vmem:[#allocation3 + $0x78] sm:$0xff]
          %946 = vmin.xlane.f32.xlu0 %v930
          %v947 = vpop.xlane.xlu0 %946
          %948 = vmin.xlane.f32.xlu0 %v931
          %v949 = vpop.xlane.xlu0 %948
          %950 = vmin.xlane.f32.xlu0 %v932
          %v951 = vpop.xlane.xlu0 %950
          %952 = vmin.xlane.f32.xlu0 %v933
          %v953 = vpop.xlane.xlu0 %952
          %954 = vmin.xlane.f32.xlu0 %v934
          %v955 = vpop.xlane.xlu0 %954
          %956 = vmin.xlane.f32.xlu0 %v935
          %v957 = vpop.xlane.xlu0 %956
          %958 = vmin.xlane.f32.xlu0 %v936
          %v959 = vpop.xlane.xlu0 %958
          %960 = vmin.xlane.f32.xlu0 %v937
          %v961 = vpop.xlane.xlu0 %960
          %962 = vmin.xlane.f32.xlu0 %v938
          %v963 = vpop.xlane.xlu0 %962
          %964 = vmin.xlane.f32.xlu0 %v939
          %v965 = vpop.xlane.xlu0 %964
          %966 = vmin.xlane.f32.xlu0 %v940
          %v967 = vpop.xlane.xlu0 %966
          %968 = vmin.xlane.f32.xlu0 %v941
          %v969 = vpop.xlane.xlu0 %968
          %970 = vmin.xlane.f32.xlu0 %v942
          %v971 = vpop.xlane.xlu0 %970
          %972 = vmin.xlane.f32.xlu0 %v943
          %v973 = vpop.xlane.xlu0 %972
          %974 = vmin.xlane.f32.xlu0 %v944
          %v975 = vpop.xlane.xlu0 %974
          %976 = vmin.xlane.f32.xlu0 %v945
          %v977 = vpop.xlane.xlu0 %976
          %v978 = vmax.f32 %v947, 0.0
          %v979 = vmax.f32 %v949, 0.0
          %v980 = vmax.f32 %v951, 0.0
          %v981 = vmax.f32 %v953, 0.0
          %v982 = vmax.f32 %v955, 0.0
          %v983 = vmax.f32 %v957, 0.0
          %v984 = vmax.f32 %v959, 0.0
          %v985 = vmax.f32 %v961, 0.0
          %v986 = vmax.f32 %v963, 0.0
          %v987 = vmax.f32 %v965, 0.0
          %v988 = vmax.f32 %v967, 0.0
          %v989 = vmax.f32 %v969, 0.0
          %v990 = vmax.f32 %v971, 0.0
          %v991 = vmax.f32 %v973, 0.0
          %v992 = vmax.f32 %v975, 0.0
          %v993 = vmax.f32 %v977, 0.0
          %vm994 = vcmp.gt.f32.partialorder %v978, 1e+20
          %vm995 = vcmp.gt.f32.partialorder %v979, 1e+20
          %vm996 = vcmp.gt.f32.partialorder %v980, 1e+20
          %vm997 = vcmp.gt.f32.partialorder %v981, 1e+20
          %vm998 = vcmp.gt.f32.partialorder %v982, 1e+20
          %vm999 = vcmp.gt.f32.partialorder %v983, 1e+20
          %vm1000 = vcmp.gt.f32.partialorder %v984, 1e+20
          %vm1001 = vcmp.gt.f32.partialorder %v985, 1e+20
          %vm1002 = vcmp.gt.f32.partialorder %v986, 1e+20
          %vm1003 = vcmp.gt.f32.partialorder %v987, 1e+20
          %vm1004 = vcmp.gt.f32.partialorder %v988, 1e+20
          %vm1005 = vcmp.gt.f32.partialorder %v989, 1e+20
          %vm1006 = vcmp.gt.f32.partialorder %v990, 1e+20
          %vm1007 = vcmp.gt.f32.partialorder %v991, 1e+20
          %vm1008 = vcmp.gt.f32.partialorder %v992, 1e+20
          %vm1009 = vcmp.gt.f32.partialorder %v993, 1e+20
          %v1010 = vrsqrt.pop %v978
          %v1011 = vmul.f32 %v978, %v1010
          %vm1012 = vcmp.eq.f32.partialorder %v978, inf
          %v1013 = vsel %vm1012, %v978, %v1011
          %vm1014 = vcmp.eq.f32.partialorder %v978, 0.0
          %v1015 = vand.u32 %v978, 2147483648
          %v1016 = vsel %vm1014, %v1015, %v1013
          %v1017 = vrsqrt.pop %v979
          %v1018 = vmul.f32 %v979, %v1017
          %vm1019 = vcmp.eq.f32.partialorder %v979, inf
          %v1020 = vsel %vm1019, %v979, %v1018
          %vm1021 = vcmp.eq.f32.partialorder %v979, 0.0
          %v1022 = vand.u32 %v979, 2147483648
          %v1023 = vsel %vm1021, %v1022, %v1020
          %v1024 = vrsqrt.pop %v980
          %v1025 = vmul.f32 %v980, %v1024
          %vm1026 = vcmp.eq.f32.partialorder %v980, inf
          %v1027 = vsel %vm1026, %v980, %v1025
          %vm1028 = vcmp.eq.f32.partialorder %v980, 0.0
          %v1029 = vand.u32 %v980, 2147483648
          %v1030 = vsel %vm1028, %v1029, %v1027
          %v1031 = vrsqrt.pop %v981
          %v1032 = vmul.f32 %v981, %v1031
          %vm1033 = vcmp.eq.f32.partialorder %v981, inf
          %v1034 = vsel %vm1033, %v981, %v1032
          %vm1035 = vcmp.eq.f32.partialorder %v981, 0.0
          %v1036 = vand.u32 %v981, 2147483648
          %v1037 = vsel %vm1035, %v1036, %v1034
          %v1038 = vrsqrt.pop %v982
          %v1039 = vmul.f32 %v982, %v1038
          %vm1040 = vcmp.eq.f32.partialorder %v982, inf
          %v1041 = vsel %vm1040, %v982, %v1039
          %vm1042 = vcmp.eq.f32.partialorder %v982, 0.0
          %v1043 = vand.u32 %v982, 2147483648
          %v1044 = vsel %vm1042, %v1043, %v1041
          %v1045 = vrsqrt.pop %v983
          %v1046 = vmul.f32 %v983, %v1045
          %vm1047 = vcmp.eq.f32.partialorder %v983, inf
          %v1048 = vsel %vm1047, %v983, %v1046
          %vm1049 = vcmp.eq.f32.partialorder %v983, 0.0
          %v1050 = vand.u32 %v983, 2147483648
          %v1051 = vsel %vm1049, %v1050, %v1048
          %v1052 = vrsqrt.pop %v984
          %v1053 = vmul.f32 %v984, %v1052
          %vm1054 = vcmp.eq.f32.partialorder %v984, inf
          %v1055 = vsel %vm1054, %v984, %v1053
          %vm1056 = vcmp.eq.f32.partialorder %v984, 0.0
          %v1057 = vand.u32 %v984, 2147483648
          %v1058 = vsel %vm1056, %v1057, %v1055
          %v1059 = vrsqrt.pop %v985
          %v1060 = vmul.f32 %v985, %v1059
          %vm1061 = vcmp.eq.f32.partialorder %v985, inf
          %v1062 = vsel %vm1061, %v985, %v1060
          %vm1063 = vcmp.eq.f32.partialorder %v985, 0.0
          %v1064 = vand.u32 %v985, 2147483648
          %v1065 = vsel %vm1063, %v1064, %v1062
          %v1066 = vrsqrt.pop %v986
          %v1067 = vmul.f32 %v986, %v1066
          %vm1068 = vcmp.eq.f32.partialorder %v986, inf
          %v1069 = vsel %vm1068, %v986, %v1067
          %vm1070 = vcmp.eq.f32.partialorder %v986, 0.0
          %v1071 = vand.u32 %v986, 2147483648
          %v1072 = vsel %vm1070, %v1071, %v1069
          %v1073 = vrsqrt.pop %v987
          %v1074 = vmul.f32 %v987, %v1073
          %vm1075 = vcmp.eq.f32.partialorder %v987, inf
          %v1076 = vsel %vm1075, %v987, %v1074
          %vm1077 = vcmp.eq.f32.partialorder %v987, 0.0
          %v1078 = vand.u32 %v987, 2147483648
          %v1079 = vsel %vm1077, %v1078, %v1076
          %v1080 = vrsqrt.pop %v988
          %v1081 = vmul.f32 %v988, %v1080
          %vm1082 = vcmp.eq.f32.partialorder %v988, inf
          %v1083 = vsel %vm1082, %v988, %v1081
          %vm1084 = vcmp.eq.f32.partialorder %v988, 0.0
          %v1085 = vand.u32 %v988, 2147483648
          %v1086 = vsel %vm1084, %v1085, %v1083
          %v1087 = vrsqrt.pop %v989
          %v1088 = vmul.f32 %v989, %v1087
          %vm1089 = vcmp.eq.f32.partialorder %v989, inf
          %v1090 = vsel %vm1089, %v989, %v1088
          %vm1091 = vcmp.eq.f32.partialorder %v989, 0.0
          %v1092 = vand.u32 %v989, 2147483648
          %v1093 = vsel %vm1091, %v1092, %v1090
          %v1094 = vrsqrt.pop %v990
          %v1095 = vmul.f32 %v990, %v1094
          %vm1096 = vcmp.eq.f32.partialorder %v990, inf
          %v1097 = vsel %vm1096, %v990, %v1095
          %vm1098 = vcmp.eq.f32.partialorder %v990, 0.0
          %v1099 = vand.u32 %v990, 2147483648
          %v1100 = vsel %vm1098, %v1099, %v1097
          %v1101 = vrsqrt.pop %v991
          %v1102 = vmul.f32 %v991, %v1101
          %vm1103 = vcmp.eq.f32.partialorder %v991, inf
          %v1104 = vsel %vm1103, %v991, %v1102
          %vm1105 = vcmp.eq.f32.partialorder %v991, 0.0
          %v1106 = vand.u32 %v991, 2147483648
          %v1107 = vsel %vm1105, %v1106, %v1104
          %v1108 = vrsqrt.pop %v992
          %v1109 = vmul.f32 %v992, %v1108
          %vm1110 = vcmp.eq.f32.partialorder %v992, inf
          %v1111 = vsel %vm1110, %v992, %v1109
          %vm1112 = vcmp.eq.f32.partialorder %v992, 0.0
          %v1113 = vand.u32 %v992, 2147483648
          %v1114 = vsel %vm1112, %v1113, %v1111
          %v1115 = vrsqrt.pop %v993
          %v1116 = vmul.f32 %v993, %v1115
          %vm1117 = vcmp.eq.f32.partialorder %v993, inf
          %v1118 = vsel %vm1117, %v993, %v1116
          %vm1119 = vcmp.eq.f32.partialorder %v993, 0.0
          %v1120 = vand.u32 %v993, 2147483648
          %v1121 = vsel %vm1119, %v1120, %v1118
          %v1122 = vsel %vm994, 0.0, %v1016
          %v1123 = vsel %vm995, 0.0, %v1023
          %v1124 = vsel %vm996, 0.0, %v1030
          %v1125 = vsel %vm997, 0.0, %v1037
          %v1126 = vsel %vm998, 0.0, %v1044
          %v1127 = vsel %vm999, 0.0, %v1051
          %v1128 = vsel %vm1000, 0.0, %v1058
          %v1129 = vsel %vm1001, 0.0, %v1065
          %v1130 = vsel %vm1002, 0.0, %v1072
          %v1131 = vsel %vm1003, 0.0, %v1079
          %v1132 = vsel %vm1004, 0.0, %v1086
          %v1133 = vsel %vm1005, 0.0, %v1093
          %v1134 = vsel %vm1006, 0.0, %v1100
          %v1135 = vsel %vm1007, 0.0, %v1107
          %v1136 = vsel %vm1008, 0.0, %v1114
          %v1137 = vsel %vm1009, 0.0, %v1121
          %v1138 = vld [vmem:[#allocation5] sm:$0x1]
          %vm1139 = vcmp.eq.s32.totalorder %v380, 3
          %vm1140 = vcmask 7168
          %v1141 = vsel %vm1140, %v1122, 0.0
          %v1142 = vsel %vm1140, %v1123, 0.0
          %v1143 = vadd.f32 %v1141, %v1142
          %v1144 = vsel %vm1140, %v1124, 0.0
          %v1145 = vadd.f32 %v1143, %v1144
          %v1146 = vsel %vm1140, %v1125, 0.0
          %v1147 = vadd.f32 %v1145, %v1146
          %v1148 = vsel %vm1140, %v1126, 0.0
          %v1149 = vadd.f32 %v1147, %v1148
          %v1150 = vsel %vm1140, %v1127, 0.0
          %v1151 = vadd.f32 %v1149, %v1150
          %v1152 = vsel %vm1140, %v1128, 0.0
          %v1153 = vadd.f32 %v1151, %v1152
          %v1154 = vsel %vm1140, %v1129, 0.0
          %v1155 = vadd.f32 %v1153, %v1154
          %v1156 = vsel %vm1140, %v1130, 0.0
          %v1157 = vadd.f32 %v1155, %v1156
          %v1158 = vsel %vm1140, %v1131, 0.0
          %v1159 = vadd.f32 %v1157, %v1158
          %v1160 = vsel %vm1140, %v1132, 0.0
          %v1161 = vadd.f32 %v1159, %v1160
          %v1162 = vsel %vm1140, %v1133, 0.0
          %v1163 = vadd.f32 %v1161, %v1162
          %v1164 = vsel %vm1140, %v1134, 0.0
          %v1165 = vadd.f32 %v1163, %v1164
          %v1166 = vsel %vm1140, %v1135, 0.0
          %v1167 = vadd.f32 %v1165, %v1166
          %v1168 = vsel %vm1140, %v1136, 0.0
          %v1169 = vadd.f32 %v1167, %v1168
          %v1170 = vsel %vm1140, %v1137, 0.0
          %v1171 = vadd.f32 %v1169, %v1170
          %1172 = vadd.xlane.f32.xlu0 %v1171
          %v1173 = vpop.xlane.xlu0 %1172
          %v1174 = vrot.slane %v1173, 4
          %v1175 = vadd.f32 %v1173, %v1174
          %v1176 = vrot.slane %v1175, 2
          %v1177 = vadd.f32 %v1175, %v1176
          %v1178 = vrot.slane %v1177, 1
          %v1179 = vadd.f32 %v1177, %v1178
          %s1180 = vtos %v1179
          %v1181 = vstv %s1180
          %v1182 = vsel %vm1139, %v1181, 0.0
          %v1183 = vadd.f32 %v1138, %v1182
          %1184 = vst [vmem:[#allocation5] sm:$0x1] %v1183
        $region88: #{tpu_custom_call.1} parent=43 // pred_fallthru
          _
        %p1185 = scmp.eq.s32.totalorder %s31, 1
        // Predicated region
        $region89: #{tpu_custom_call.1} parent=43 // pred_check
          %p1186 = pneg %p1185
        $region90: #{tpu_custom_call.1} parent=43 // pred_check_branch
          %1188 = sbr.rel (%p1186) target = $region92
        $region91: #{tpu_custom_call.1} parent=43 // pred_region
          %s1189 = scalar_lea.vmem [#allocation4], %s597
          %v1190 = vld [vmem:[%s1189] sm:$0xff]
          %v1191 = vrot.slane %v1190, 4
          %v1192 = vmin.f32 %v1190, %v1191
          %v1193 = vrot.slane %v1192, 2
          %v1194 = vmin.f32 %v1192, %v1193
          %v1195 = vrot.slane %v1194, 1
          %v1196 = vmin.f32 %v1194, %v1195
          %v1197 = vmax.f32 %v1196, 0.0
          %vm1198 = vcmp.gt.f32.partialorder %v1197, 1e+20
          %v1199 = vrsqrt.pop %v1197
          %v1200 = vmul.f32 %v1197, %v1199
          %vm1201 = vcmp.eq.f32.partialorder %v1197, inf
          %v1202 = vsel %vm1201, %v1197, %v1200
          %vm1203 = vcmp.eq.f32.partialorder %v1197, 0.0
          %v1204 = vand.u32 %v1197, 2147483648
          %v1205 = vsel %vm1203, %v1204, %v1202
          %v1206 = vsel %vm1198, 0.0, %v1205
          %v1207 = vld [vmem:[#allocation5] sm:$0x1]
          %vm1208 = vcmp.eq.s32.totalorder %v380, 4
          %vm1209 = vcmask 1040384
          %v1210 = vsel %vm1209, %v1206, 0.0
          %1211 = vadd.xlane.f32.xlu0 %v1210
          %v1212 = vpop.xlane.xlu0 %1211
          %v1213 = vrot.slane %v1212, 4
          %v1214 = vadd.f32 %v1212, %v1213
          %v1215 = vrot.slane %v1214, 2
          %v1216 = vadd.f32 %v1214, %v1215
          %v1217 = vrot.slane %v1216, 1
          %v1218 = vadd.f32 %v1216, %v1217
          %s1219 = vtos %v1218
          %v1220 = vstv %s1219
          %v1221 = vsel %vm1208, %v1220, 0.0
          %v1222 = vadd.f32 %v1207, %v1221
          %1223 = vst [vmem:[#allocation5] sm:$0x1] %v1222
        $region92: #{tpu_custom_call.1} parent=43 // pred_fallthru
          _
        %p1224 = pnand %p1185, %p926
        %p1225 = pneg %p1224
        // Predicated region
        $region93: #{tpu_custom_call.1} parent=43 // pred_check
          _
        $region94: #{tpu_custom_call.1} parent=43 // pred_check_branch
          %1227 = sbr.rel (%p1224) target = $region96
        $region95: #{tpu_custom_call.1} parent=43 // pred_region
          %v1228 = vld [vmem:[#allocation5] sm:$0x1]
          %1229 = vst [vmem:[%s365] sm:$0x1] %v1228
        $region96: #{tpu_custom_call.1} parent=43 // pred_fallthru
          _
        %s1230 = sand.u32 %s197, 1
        %s1231 = scalar_lea.sflag [#allocation8], %s1230
        %s1232 = sand.u32 %s197, 1
        %s1233 = scalar_lea.vmem [#allocation14], %s1232
        // Predicated region
        $region97: #{tpu_custom_call.1} parent=43 // pred_check
          %p1234 = pneg %p207
        $region98: #{tpu_custom_call.1} parent=43 // pred_check_branch
          %1236 = sbr.rel (%p1234) target = $region100
        $region99: #{tpu_custom_call.1} parent=43 // pred_region
          %s1238 = ssub.s32 16, 16
          %1239 = vsyncadd %s1231, %s1238
          %s1240 = smul.addr %s30, 16
          %s1241 = scalar_lea.hbm %s6, %s1240
          %s1243 = sshll.u32 %s1233, 4
          %s1244 = int_to_ptr.vmem [resolvable:$true] %s1243
          %1246 = dma.vmem_to_hbm [thread:$0]  %s1244, 16, %s1241, %s1231
        $region100: #{tpu_custom_call.1} parent=43 // pred_fallthru
          _
      $region44: #{tpu_custom_call.1} parent=5 // pred_fallthru
        _
      %p1247 = scmp.le.s32.totalorder 2, %s20
      // Predicated region
      $region101: #{tpu_custom_call.1} parent=5 // pred_check
        %p1248 = pneg %p1247
      $region102: #{tpu_custom_call.1} parent=5 // pred_check_branch
        %1250 = sbr.rel (%p1248) target = $region104
      $region103: #{tpu_custom_call.1} parent=5 // pred_region
        %s1251 = ssub.s32 %s20, 2
        // Predicated region
        $region105: #{tpu_custom_call.1} parent=103 // pred_check
          %p1252 = pneg %p213
        $region106: #{tpu_custom_call.1} parent=103 // pred_check_branch
          %1254 = sbr.rel (%p1252) target = $region108
        $region107: #{tpu_custom_call.1} parent=103 // pred_region
          %s1255 = sand.u32 %s198, 1
          %s1256 = scalar_lea.sflag [#allocation8], %s1255
          %s1257 = sand.u32 %s198, 1
          %s1258 = scalar_lea.vmem [#allocation14], %s1257
          %1259 = dma.done %s1256, 16
        $region108: #{tpu_custom_call.1} parent=103 // pred_fallthru
          _
      $region104: #{tpu_custom_call.1} parent=5 // pred_fallthru
        _
    $region6: #{tpu_custom_call.1} parent=1 // loop_footer
      %s24 = sadd.s32 1, %s20
    $region7: #{tpu_custom_call.1} parent=1 // loop_footer_branch
      %19 = sbr.rel target = $region3
    $region8: #{tpu_custom_call.1} parent=1 // loop_exit
      _
    %1260 = vsyncpa [#allocation7], 1
    %s1261 = scalar_lea.sflag [#allocation7], 1
    %1262 = vsyncpa %s1261, 1
    %1263 = vsyncpa [#allocation8], 1
    %s1264 = scalar_lea.sflag [#allocation8], 1
    %1265 = vsyncpa %s1264, 1
    %1266 = vsyncpa [#allocation9], 1
    %s1267 = scalar_lea.sflag [#allocation9], 1
    %1268 = vsyncpa %s1267, 1
    %1269 = vsyncpa [#allocation11], 1

</llo_original>
